<compile_context>
chip_gen: v5e
topology: v5e:2x2
jax: 0.10.0
libtpu: 0.0.40
codegen_flags: <defaults>
</compile_context>

<pallas_src>
import math

import jax
import jax.numpy as jnp
from jax.experimental import pallas as pl

# ---- model hyper-parameters (small, consistent with the module) ----
B = 2            # batch
T = 8            # sequence length (self-attention: keys == queries)
D_MODEL = 32     # d_model
N_HEADS = 4      # heads in MultiHeadedAttention
D_HEAD = D_MODEL // N_HEADS
D_FF = 64        # feed-forward hidden size
EPS = 1e-6
NEG_INF = -1e9


# ---------------- shared math (pure jnp; used inside the kernel AND as reference) ----
def _layernorm(x, a, b):
    # Annotated-Transformer LayerNorm: unbiased std, eps added to the std.
    mean = jnp.mean(x, axis=-1, keepdims=True)
    var = jnp.sum((x - mean) ** 2, axis=-1, keepdims=True) / (x.shape[-1] - 1)
    return a * (x - mean) / (jnp.sqrt(var) + EPS) + b


def _softmax(s):
    m = jnp.max(s, axis=-1, keepdims=True)
    e = jnp.exp(s - m)
    return e / jnp.sum(e, axis=-1, keepdims=True)


def _encoder_layer_math(x, mask3, ln_a, ln_b, w_qkv, b_qkv, wo, bo,
                        ff_w1, ff_b1, ff_w2, ff_b2):
    """x: (B*T, D); mask3: (B, T, T) float (1 keep / 0 mask). Pure jnp."""
    scale = 1.0 / math.sqrt(D_HEAD)
    masked = mask3 == 0.0                      # hoisted: computed once, reused per head

    # ---- sublayer 1: pre-norm multi-head self-attention + residual ----
    xn = _layernorm(x, ln_a[0], ln_b[0])       # (B*T, D)
    attn = jnp.zeros((B * T, D_MODEL), jnp.float32)
    for h in range(N_HEADS):                   # static unroll; weights pre-split per head
        qh = (jnp.dot(xn, w_qkv[0, h], preferred_element_type=jnp.float32)
              + b_qkv[0, h]) * scale           # 1/sqrt(dk) folded into q
        kh = jnp.dot(xn, w_qkv[1, h], preferred_element_type=jnp.float32) + b_qkv[1, h]
        vh = jnp.dot(xn, w_qkv[2, h], preferred_element_type=jnp.float32) + b_qkv[2, h]
        qh = qh.reshape(B, T, D_HEAD)
        kh = kh.reshape(B, T, D_HEAD)
        vh = vh.reshape(B, T, D_HEAD)
        # contract on the last axis of both operands -> no materialized K transpose
        s = jnp.einsum('bqd,bkd->bqk', qh, kh, preferred_element_type=jnp.float32)
        s = jnp.where(masked, NEG_INF, s)      # masked_fill(mask == 0, -1e9)
        p = _softmax(s)
        # TODO(synk): attention / residual dropout omitted (eval-mode identity).
        ctx = jnp.einsum('bqk,bkd->bqd', p, vh, preferred_element_type=jnp.float32)
        # concat(heads) @ Wo  ==  sum_h ctx_h @ Wo[h]  -> no concat / lane shuffles
        attn = attn + jnp.dot(ctx.reshape(B * T, D_HEAD), wo[h],
                              preferred_element_type=jnp.float32)
    x = x + attn + bo

    # ---- sublayer 2: pre-norm feed-forward + residual ----
    xn = _layernorm(x, ln_a[1], ln_b[1])
    hidden = jnp.maximum(
        jnp.dot(xn, ff_w1, preferred_element_type=jnp.float32) + ff_b1, 0.0)
    return x + jnp.dot(hidden, ff_w2, preferred_element_type=jnp.float32) + ff_b2


# ---------------- Pallas kernel ----------------
def encoder_layer_kernel(x_ref, mask_ref, ln_a_ref, ln_b_ref,
                         w_qkv_ref, b_qkv_ref, wo_ref, bo_ref,
                         ff_w1_ref, ff_b1_ref, ff_w2_ref, ff_b2_ref,
                         out_ref):
    out_ref[...] = _encoder_layer_math(
        x_ref[...], mask_ref[...],
        ln_a_ref[...], ln_b_ref[...],
        w_qkv_ref[...], b_qkv_ref[...], wo_ref[...], bo_ref[...],
        ff_w1_ref[...], ff_b1_ref[...], ff_w2_ref[...], ff_b2_ref[...])


# ---------------- wrapper ----------------
@jax.jit
def encoder_layer(x, mask, params):
    """x: (B, T, D); mask: (B, T) float (1 = attend, 0 = masked)."""
    x2d = x.reshape(B * T, D_MODEL)                              # host-side flatten (free)
    mask3 = jnp.broadcast_to(mask[:, None, :], (B, T, T))        # hoisted mask preprocessing
    # Single invocation, no grid: every operand (a few KB) lives whole in VMEM,
    # both residual sublayers run in one kernel with no intermediate HBM traffic.
    out = pl.pallas_call(
        encoder_layer_kernel,
        out_shape=jax.ShapeDtypeStruct((B * T, D_MODEL), jnp.float32),
    )(x2d, mask3,
      params["ln_a"], params["ln_b"],
      params["w_qkv"], params["b_qkv"], params["wo"], params["bo"],
      params["ff_w1"], params["ff_b1"], params["ff_w2"], params["ff_b2"])
    return out.reshape(B, T, D_MODEL)


# ---------------- parameter init (PyTorch-layout) + kernel-layout conversion ----
def init_full_params(key):
    ks = jax.random.split(key, 14)
    s = 0.08
    return {
        "Wq": s * jax.random.normal(ks[0], (D_MODEL, D_MODEL), jnp.float32),
        "Wk": s * jax.random.normal(ks[1], (D_MODEL, D_MODEL), jnp.float32),
        "Wv": s * jax.random.normal(ks[2], (D_MODEL, D_MODEL), jnp.float32),
        "Wo": s * jax.random.normal(ks[3], (D_MODEL, D_MODEL), jnp.float32),
        "bq": s * jax.random.normal(ks[4], (D_MODEL,), jnp.float32),
        "bk": s * jax.random.normal(ks[5], (D_MODEL,), jnp.float32),
        "bv": s * jax.random.normal(ks[6], (D_MODEL,), jnp.float32),
        "bo": s * jax.random.normal(ks[7], (D_MODEL,), jnp.float32),
        "ff_w1": s * jax.random.normal(ks[8], (D_MODEL, D_FF), jnp.float32),
        "ff_b1": s * jax.random.normal(ks[9], (D_FF,), jnp.float32),
        "ff_w2": s * jax.random.normal(ks[10], (D_FF, D_MODEL), jnp.float32),
        "ff_b2": s * jax.random.normal(ks[11], (D_MODEL,), jnp.float32),
        "ln_a": 1.0 + 0.1 * jax.random.normal(ks[12], (2, D_MODEL), jnp.float32),
        "ln_b": 0.1 * jax.random.normal(ks[13], (2, D_MODEL), jnp.float32),
    }


def to_kernel_params(full):
    """Split Q/K/V into per-head column blocks and Wo into per-head row blocks host-side."""
    def split_w(w):   # (D, D) -> (H, D, dk): per-head column block
        return w.reshape(D_MODEL, N_HEADS, D_HEAD).transpose(1, 0, 2)

    def split_b(b):   # (D,) -> (H, 1, dk)
        return b.reshape(N_HEADS, 1, D_HEAD)

    return {
        "ln_a": full["ln_a"][:, None, :],     # (2, 1, D)
        "ln_b": full["ln_b"][:, None, :],     # (2, 1, D)
        "w_qkv": jnp.stack([split_w(full["Wq"]), split_w(full["Wk"]), split_w(full["Wv"])]),
        "b_qkv": jnp.stack([split_b(full["bq"]), split_b(full["bk"]), split_b(full["bv"])]),
        "wo": full["Wo"].reshape(N_HEADS, D_HEAD, D_MODEL),   # (H, dk, D): per-head row block
        "bo": full["bo"][None, :],            # (1, D)
        "ff_w1": full["ff_w1"],
        "ff_b1": full["ff_b1"][None, :],
        "ff_w2": full["ff_w2"],
        "ff_b2": full["ff_b2"][None, :],
    }


# ---------------- references ----------------
def reference_same_math(x, mask, kp):
    """Same math as the kernel, executed by plain XLA (tight check on Pallas lowering)."""
    mask3 = jnp.broadcast_to(mask[:, None, :], (B, T, T))
    out = _encoder_layer_math(
        x.reshape(B * T, D_MODEL), mask3,
        kp["ln_a"], kp["ln_b"], kp["w_qkv"], kp["b_qkv"], kp["wo"], kp["bo"],
        kp["ff_w1"], kp["ff_b1"], kp["ff_w2"], kp["ff_b2"])
    return out.reshape(B, T, D_MODEL)


def reference_torch_style(x, mask, fp):
    """Faithful replica of the PyTorch EncoderLayer forward (eval mode), full matrices."""
    def layernorm(t, a, b):
        mean = t.mean(-1, keepdims=True)
        var = jnp.sum((t - mean) ** 2, -1, keepdims=True) / (t.shape[-1] - 1)
        return a * (t - mean) / (jnp.sqrt(var) + EPS) + b

    def mha(q_in, k_in, v_in, m):
        def split(t):   # (B, T, D) -> (B, H, T, dk)
            return t.reshape(B, T, N_HEADS, D_HEAD).transpose(0, 2, 1, 3)
        q = split(q_in @ fp["Wq"] + fp["bq"])
        k = split(k_in @ fp["Wk"] + fp["bk"])
        v = split(v_in @ fp["Wv"] + fp["bv"])
        s = jnp.einsum('bhqd,bhkd->bhqk', q, k) / math.sqrt(D_HEAD)
        s = jnp.where(m[:, None, None, :] == 0, NEG_INF, s)
        p = jax.nn.softmax(s, axis=-1)
        ctx = jnp.einsum('bhqk,bhkd->bhqd', p, v)
        ctx = ctx.transpose(0, 2, 1, 3).reshape(B, T, D_MODEL)
        return ctx @ fp["Wo"] + fp["bo"]

    xn = layernorm(x, fp["ln_a"][0], fp["ln_b"][0])
    x = x + mha(xn, xn, xn, mask)
    xn = layernorm(x, fp["ln_a"][1], fp["ln_b"][1])
    h = jnp.maximum(xn @ fp["ff_w1"] + fp["ff_b1"], 0.0)
    return x + h @ fp["ff_w2"] + fp["ff_b2"]


if __name__ == "__main__":
    key = jax.random.PRNGKey(0)
    k_x, k_p = jax.random.split(key, 2)

    x = jax.random.normal(k_x, (B, T, D_MODEL), jnp.float32)
    # padding-style mask: batch 0 attends everywhere, batch 1 masks its last 2 positions
    mask = jnp.ones((B, T), jnp.float32).at[1, T - 2:].set(0.0)

    full_params = init_full_params(k_p)
    kernel_params = to_kernel_params(full_params)

    out = jax.block_until_ready(encoder_layer(x, mask, kernel_params))
    assert out.shape == (B, T, D_MODEL)

    # Tight check: identical math, Pallas (Mosaic) vs plain XLA.
    ref_tight = reference_same_math(x, mask, kernel_params)
    assert jnp.allclose(out, ref_tight, atol=1e-4, rtol=1e-4), \
        "mismatch vs same-math reference"

    # Independent check vs the standard PyTorch-style formulation (full matrices,
    # head split via reshape/transpose, score division, concat + Wo). Loose tolerance
    # because TPU default matmul precision + different op grouping can legitimately
    # differ at the ~1e-3 level; real layout bugs would be >> 1e-2.
    ref_torch = reference_torch_style(x, mask, full_params)
    assert jnp.allclose(out, ref_torch, atol=1e-2, rtol=1e-2), \
        "mismatch vs torch-style reference"

    print("KERNEL_OK")
</pallas_src>

<mosaic_0001>
module attributes {stable_mosaic.version = 11 : i64} {
  func.func @encoder_layer_kernel(%arg0: memref<16x32xf32, #tpu.memory_space<vmem>>, %arg1: memref<2x8x8xf32, #tpu.memory_space<vmem>>, %arg2: memref<2x1x32xf32, #tpu.memory_space<vmem>>, %arg3: memref<2x1x32xf32, #tpu.memory_space<vmem>>, %arg4: memref<3x4x32x8xf32, #tpu.memory_space<vmem>>, %arg5: memref<3x4x1x8xf32, #tpu.memory_space<vmem>>, %arg6: memref<4x8x32xf32, #tpu.memory_space<vmem>>, %arg7: memref<1x32xf32, #tpu.memory_space<vmem>>, %arg8: memref<32x64xf32, #tpu.memory_space<vmem>>, %arg9: memref<1x64xf32, #tpu.memory_space<vmem>>, %arg10: memref<64x32xf32, #tpu.memory_space<vmem>>, %arg11: memref<1x32xf32, #tpu.memory_space<vmem>>, %arg12: memref<16x32xf32, #tpu.memory_space<vmem>>) attributes {dimension_semantics = [], scalar_prefetch = 0 : i64, scratch_operands = 0 : i64, tpu.core_type = #tpu.core_type<tc>} {
    %c0 = arith.constant 0 : index
    %c0_0 = arith.constant 0 : index
    %0 = vector.load %arg0[%c0, %c0_0] : memref<16x32xf32, #tpu.memory_space<vmem>>, vector<16x32xf32>
    %c0_1 = arith.constant 0 : index
    %c0_2 = arith.constant 0 : index
    %c0_3 = arith.constant 0 : index
    %1 = vector.load %arg1[%c0_1, %c0_2, %c0_3] : memref<2x8x8xf32, #tpu.memory_space<vmem>>, vector<2x8x8xf32>
    %c0_4 = arith.constant 0 : index
    %c0_5 = arith.constant 0 : index
    %c0_6 = arith.constant 0 : index
    %2 = vector.load %arg2[%c0_4, %c0_5, %c0_6] : memref<2x1x32xf32, #tpu.memory_space<vmem>>, vector<2x1x32xf32>
    %c0_7 = arith.constant 0 : index
    %c0_8 = arith.constant 0 : index
    %c0_9 = arith.constant 0 : index
    %3 = vector.load %arg3[%c0_7, %c0_8, %c0_9] : memref<2x1x32xf32, #tpu.memory_space<vmem>>, vector<2x1x32xf32>
    %c0_10 = arith.constant 0 : index
    %c0_11 = arith.constant 0 : index
    %c0_12 = arith.constant 0 : index
    %c0_13 = arith.constant 0 : index
    %4 = vector.load %arg4[%c0_10, %c0_11, %c0_12, %c0_13] : memref<3x4x32x8xf32, #tpu.memory_space<vmem>>, vector<3x4x32x8xf32>
    %c0_14 = arith.constant 0 : index
    %c0_15 = arith.constant 0 : index
    %c0_16 = arith.constant 0 : index
    %c0_17 = arith.constant 0 : index
    %5 = vector.load %arg5[%c0_14, %c0_15, %c0_16, %c0_17] : memref<3x4x1x8xf32, #tpu.memory_space<vmem>>, vector<3x4x1x8xf32>
    %c0_18 = arith.constant 0 : index
    %c0_19 = arith.constant 0 : index
    %c0_20 = arith.constant 0 : index
    %6 = vector.load %arg6[%c0_18, %c0_19, %c0_20] : memref<4x8x32xf32, #tpu.memory_space<vmem>>, vector<4x8x32xf32>
    %c0_21 = arith.constant 0 : index
    %c0_22 = arith.constant 0 : index
    %7 = vector.load %arg7[%c0_21, %c0_22] : memref<1x32xf32, #tpu.memory_space<vmem>>, vector<1x32xf32>
    %c0_23 = arith.constant 0 : index
    %c0_24 = arith.constant 0 : index
    %8 = vector.load %arg8[%c0_23, %c0_24] : memref<32x64xf32, #tpu.memory_space<vmem>>, vector<32x64xf32>
    %c0_25 = arith.constant 0 : index
    %c0_26 = arith.constant 0 : index
    %9 = vector.load %arg9[%c0_25, %c0_26] : memref<1x64xf32, #tpu.memory_space<vmem>>, vector<1x64xf32>
    %c0_27 = arith.constant 0 : index
    %c0_28 = arith.constant 0 : index
    %10 = vector.load %arg10[%c0_27, %c0_28] : memref<64x32xf32, #tpu.memory_space<vmem>>, vector<64x32xf32>
    %c0_29 = arith.constant 0 : index
    %c0_30 = arith.constant 0 : index
    %11 = vector.load %arg11[%c0_29, %c0_30] : memref<1x32xf32, #tpu.memory_space<vmem>>, vector<1x32xf32>
    %cst = arith.constant 0.000000e+00 : f32
    %12 = vector.broadcast %cst : f32 to vector<2x8x8xf32>
    %13 = arith.cmpf oeq, %1, %12 : vector<2x8x8xf32>
    %14 = vector.extract_strided_slice %2 {offsets = [0, 0, 0], sizes = [1, 1, 32], strides = [1, 1, 1]} : vector<2x1x32xf32> to vector<1x1x32xf32>
    %15 = vector.shape_cast %14 : vector<1x1x32xf32> to vector<1x32xf32>
    %16 = vector.extract_strided_slice %3 {offsets = [0, 0, 0], sizes = [1, 1, 32], strides = [1, 1, 1]} : vector<2x1x32xf32> to vector<1x1x32xf32>
    %17 = vector.shape_cast %16 : vector<1x1x32xf32> to vector<1x32xf32>
    %cst_31 = arith.constant dense<0.000000e+00> : vector<16xf32>
    %18 = vector.multi_reduction <add>, %0, %cst_31 [1] : vector<16x32xf32> to vector<16xf32>
    %19 = vector.shape_cast %18 : vector<16xf32> to vector<16x1xf32>
    %cst_32 = arith.constant 3.200000e+01 : f32
    %20 = vector.broadcast %cst_32 : f32 to vector<16x1xf32>
    %21 = arith.divf %19, %20 : vector<16x1xf32>
    %22 = vector.broadcast %21 : vector<16x1xf32> to vector<16x32xf32>
    %23 = arith.subf %0, %22 : vector<16x32xf32>
    %24 = arith.mulf %23, %23 : vector<16x32xf32>
    %cst_33 = arith.constant dense<0.000000e+00> : vector<16xf32>
    %25 = vector.multi_reduction <add>, %24, %cst_33 [1] : vector<16x32xf32> to vector<16xf32>
    %26 = vector.shape_cast %25 : vector<16xf32> to vector<16x1xf32>
    %cst_34 = arith.constant 3.100000e+01 : f32
    %27 = vector.broadcast %cst_34 : f32 to vector<16x1xf32>
    %28 = arith.divf %26, %27 : vector<16x1xf32>
    %29 = vector.broadcast %21 : vector<16x1xf32> to vector<16x32xf32>
    %30 = arith.subf %0, %29 : vector<16x32xf32>
    %31 = vector.broadcast %15 : vector<1x32xf32> to vector<16x32xf32>
    %32 = arith.mulf %31, %30 : vector<16x32xf32>
    %33 = math.sqrt %28 : vector<16x1xf32>
    %cst_35 = arith.constant 9.99999997E-7 : f32
    %34 = vector.broadcast %cst_35 : f32 to vector<16x1xf32>
    %35 = arith.addf %33, %34 : vector<16x1xf32>
    %36 = vector.broadcast %35 : vector<16x1xf32> to vector<16x32xf32>
    %37 = arith.divf %32, %36 : vector<16x32xf32>
    %38 = vector.broadcast %17 : vector<1x32xf32> to vector<16x32xf32>
    %39 = arith.addf %37, %38 : vector<16x32xf32>
    %cst_36 = arith.constant 0.000000e+00 : f32
    %40 = vector.broadcast %cst_36 : f32 to vector<16x32xf32>
    %41 = vector.extract_strided_slice %4 {offsets = [0, 0, 0, 0], sizes = [1, 1, 32, 8], strides = [1, 1, 1, 1]} : vector<3x4x32x8xf32> to vector<1x1x32x8xf32>
    %42 = vector.shape_cast %41 : vector<1x1x32x8xf32> to vector<32x8xf32>
    %cst_37 = arith.constant dense<0.000000e+00> : vector<16x8xf32>
    %43 = tpu.matmul %39, %42, %cst_37 {dimension_numbers = #tpu.dot_dimension_numbers<[1], [0], [0], [1], [0, 0, 1, 1], [], []>} : vector<16x32xf32>, vector<32x8xf32>, vector<16x8xf32> -> vector<16x8xf32>
    %44 = vector.extract_strided_slice %5 {offsets = [0, 0, 0, 0], sizes = [1, 1, 1, 8], strides = [1, 1, 1, 1]} : vector<3x4x1x8xf32> to vector<1x1x1x8xf32>
    %45 = vector.shape_cast %44 : vector<1x1x1x8xf32> to vector<1x8xf32>
    %46 = vector.broadcast %45 : vector<1x8xf32> to vector<16x8xf32>
    %47 = arith.addf %43, %46 : vector<16x8xf32>
    %cst_38 = arith.constant 0.353553385 : f32
    %48 = vector.broadcast %cst_38 : f32 to vector<16x8xf32>
    %49 = arith.mulf %47, %48 : vector<16x8xf32>
    %50 = vector.extract_strided_slice %4 {offsets = [1, 0, 0, 0], sizes = [1, 1, 32, 8], strides = [1, 1, 1, 1]} : vector<3x4x32x8xf32> to vector<1x1x32x8xf32>
    %51 = vector.shape_cast %50 : vector<1x1x32x8xf32> to vector<32x8xf32>
    %cst_39 = arith.constant dense<0.000000e+00> : vector<16x8xf32>
    %52 = tpu.matmul %39, %51, %cst_39 {dimension_numbers = #tpu.dot_dimension_numbers<[1], [0], [0], [1], [0, 0, 1, 1], [], []>} : vector<16x32xf32>, vector<32x8xf32>, vector<16x8xf32> -> vector<16x8xf32>
    %53 = vector.extract_strided_slice %5 {offsets = [1, 0, 0, 0], sizes = [1, 1, 1, 8], strides = [1, 1, 1, 1]} : vector<3x4x1x8xf32> to vector<1x1x1x8xf32>
    %54 = vector.shape_cast %53 : vector<1x1x1x8xf32> to vector<1x8xf32>
    %55 = vector.broadcast %54 : vector<1x8xf32> to vector<16x8xf32>
    %56 = arith.addf %52, %55 : vector<16x8xf32>
    %57 = vector.extract_strided_slice %4 {offsets = [2, 0, 0, 0], sizes = [1, 1, 32, 8], strides = [1, 1, 1, 1]} : vector<3x4x32x8xf32> to vector<1x1x32x8xf32>
    %58 = vector.shape_cast %57 : vector<1x1x32x8xf32> to vector<32x8xf32>
    %cst_40 = arith.constant dense<0.000000e+00> : vector<16x8xf32>
    %59 = tpu.matmul %39, %58, %cst_40 {dimension_numbers = #tpu.dot_dimension_numbers<[1], [0], [0], [1], [0, 0, 1, 1], [], []>} : vector<16x32xf32>, vector<32x8xf32>, vector<16x8xf32> -> vector<16x8xf32>
    %60 = vector.extract_strided_slice %5 {offsets = [2, 0, 0, 0], sizes = [1, 1, 1, 8], strides = [1, 1, 1, 1]} : vector<3x4x1x8xf32> to vector<1x1x1x8xf32>
    %61 = vector.shape_cast %60 : vector<1x1x1x8xf32> to vector<1x8xf32>
    %62 = vector.broadcast %61 : vector<1x8xf32> to vector<16x8xf32>
    %63 = arith.addf %59, %62 : vector<16x8xf32>
    %64 = vector.shape_cast %49 : vector<16x8xf32> to vector<2x8x8xf32>
    %65 = vector.shape_cast %56 : vector<16x8xf32> to vector<2x8x8xf32>
    %66 = vector.shape_cast %63 : vector<16x8xf32> to vector<2x8x8xf32>
    "tpu.trace_start"() <{level = 10 : i32, message = "bqd,bkd->bqk"}> : () -> ()
    %cst_41 = arith.constant dense<0.000000e+00> : vector<2x8x8xf32>
    %67 = tpu.matmul %64, %65, %cst_41 {dimension_numbers = #tpu.dot_dimension_numbers<[2], [2], [1], [1], [0, 0, 0, 1, 1, 1], [0], [0]>} : vector<2x8x8xf32>, vector<2x8x8xf32>, vector<2x8x8xf32> -> vector<2x8x8xf32>
    %cst_42 = arith.constant -1.000000e+09 : f32
    "tpu.trace_stop"() : () -> ()
    %68 = vector.broadcast %cst_42 : f32 to vector<2x8x8xf32>
    %69 = arith.select %13, %68, %67 : vector<2x8x8xi1>, vector<2x8x8xf32>
    %cst_43 = arith.constant dense<0xFF800000> : vector<2x8xf32>
    %70 = vector.multi_reduction <maximumf>, %69, %cst_43 [2] : vector<2x8x8xf32> to vector<2x8xf32>
    %71 = vector.shape_cast %70 : vector<2x8xf32> to vector<2x8x1xf32>
    %72 = vector.broadcast %71 : vector<2x8x1xf32> to vector<2x8x8xf32>
    %73 = arith.subf %69, %72 : vector<2x8x8xf32>
    %74 = math.exp %73 : vector<2x8x8xf32>
    %cst_44 = arith.constant dense<0.000000e+00> : vector<2x8xf32>
    %75 = vector.multi_reduction <add>, %74, %cst_44 [2] : vector<2x8x8xf32> to vector<2x8xf32>
    %76 = vector.shape_cast %75 : vector<2x8xf32> to vector<2x8x1xf32>
    %77 = vector.broadcast %76 : vector<2x8x1xf32> to vector<2x8x8xf32>
    %78 = arith.divf %74, %77 : vector<2x8x8xf32>
    "tpu.trace_start"() <{level = 10 : i32, message = "bqk,bkd->bqd"}> : () -> ()
    %cst_45 = arith.constant dense<0.000000e+00> : vector<2x8x8xf32>
    %79 = tpu.matmul %78, %66, %cst_45 {dimension_numbers = #tpu.dot_dimension_numbers<[2], [1], [1], [2], [0, 0, 0, 1, 1, 2], [0], [0]>} : vector<2x8x8xf32>, vector<2x8x8xf32>, vector<2x8x8xf32> -> vector<2x8x8xf32>
    "tpu.trace_stop"() : () -> ()
    %80 = vector.shape_cast %79 : vector<2x8x8xf32> to vector<16x8xf32>
    %81 = vector.extract_strided_slice %6 {offsets = [0, 0, 0], sizes = [1, 8, 32], strides = [1, 1, 1]} : vector<4x8x32xf32> to vector<1x8x32xf32>
    %82 = vector.shape_cast %81 : vector<1x8x32xf32> to vector<8x32xf32>
    %cst_46 = arith.constant dense<0.000000e+00> : vector<16x32xf32>
    %83 = tpu.matmul %80, %82, %cst_46 {dimension_numbers = #tpu.dot_dimension_numbers<[1], [0], [0], [1], [0, 0, 1, 1], [], []>} : vector<16x8xf32>, vector<8x32xf32>, vector<16x32xf32> -> vector<16x32xf32>
    %84 = arith.addf %40, %83 : vector<16x32xf32>
    %85 = vector.extract_strided_slice %4 {offsets = [0, 1, 0, 0], sizes = [1, 1, 32, 8], strides = [1, 1, 1, 1]} : vector<3x4x32x8xf32> to vector<1x1x32x8xf32>
    %86 = vector.shape_cast %85 : vector<1x1x32x8xf32> to vector<32x8xf32>
    %cst_47 = arith.constant dense<0.000000e+00> : vector<16x8xf32>
    %87 = tpu.matmul %39, %86, %cst_47 {dimension_numbers = #tpu.dot_dimension_numbers<[1], [0], [0], [1], [0, 0, 1, 1], [], []>} : vector<16x32xf32>, vector<32x8xf32>, vector<16x8xf32> -> vector<16x8xf32>
    %88 = vector.extract_strided_slice %5 {offsets = [0, 1, 0, 0], sizes = [1, 1, 1, 8], strides = [1, 1, 1, 1]} : vector<3x4x1x8xf32> to vector<1x1x1x8xf32>
    %89 = vector.shape_cast %88 : vector<1x1x1x8xf32> to vector<1x8xf32>
    %90 = vector.broadcast %89 : vector<1x8xf32> to vector<16x8xf32>
    %91 = arith.addf %87, %90 : vector<16x8xf32>
    %cst_48 = arith.constant 0.353553385 : f32
    %92 = vector.broadcast %cst_48 : f32 to vector<16x8xf32>
    %93 = arith.mulf %91, %92 : vector<16x8xf32>
    %94 = vector.extract_strided_slice %4 {offsets = [1, 1, 0, 0], sizes = [1, 1, 32, 8], strides = [1, 1, 1, 1]} : vector<3x4x32x8xf32> to vector<1x1x32x8xf32>
    %95 = vector.shape_cast %94 : vector<1x1x32x8xf32> to vector<32x8xf32>
    %cst_49 = arith.constant dense<0.000000e+00> : vector<16x8xf32>
    %96 = tpu.matmul %39, %95, %cst_49 {dimension_numbers = #tpu.dot_dimension_numbers<[1], [0], [0], [1], [0, 0, 1, 1], [], []>} : vector<16x32xf32>, vector<32x8xf32>, vector<16x8xf32> -> vector<16x8xf32>
    %97 = vector.extract_strided_slice %5 {offsets = [1, 1, 0, 0], sizes = [1, 1, 1, 8], strides = [1, 1, 1, 1]} : vector<3x4x1x8xf32> to vector<1x1x1x8xf32>
    %98 = vector.shape_cast %97 : vector<1x1x1x8xf32> to vector<1x8xf32>
    %99 = vector.broadcast %98 : vector<1x8xf32> to vector<16x8xf32>
    %100 = arith.addf %96, %99 : vector<16x8xf32>
    %101 = vector.extract_strided_slice %4 {offsets = [2, 1, 0, 0], sizes = [1, 1, 32, 8], strides = [1, 1, 1, 1]} : vector<3x4x32x8xf32> to vector<1x1x32x8xf32>
    %102 = vector.shape_cast %101 : vector<1x1x32x8xf32> to vector<32x8xf32>
    %cst_50 = arith.constant dense<0.000000e+00> : vector<16x8xf32>
    %103 = tpu.matmul %39, %102, %cst_50 {dimension_numbers = #tpu.dot_dimension_numbers<[1], [0], [0], [1], [0, 0, 1, 1], [], []>} : vector<16x32xf32>, vector<32x8xf32>, vector<16x8xf32> -> vector<16x8xf32>
    %104 = vector.extract_strided_slice %5 {offsets = [2, 1, 0, 0], sizes = [1, 1, 1, 8], strides = [1, 1, 1, 1]} : vector<3x4x1x8xf32> to vector<1x1x1x8xf32>
    %105 = vector.shape_cast %104 : vector<1x1x1x8xf32> to vector<1x8xf32>
    %106 = vector.broadcast %105 : vector<1x8xf32> to vector<16x8xf32>
    %107 = arith.addf %103, %106 : vector<16x8xf32>
    %108 = vector.shape_cast %93 : vector<16x8xf32> to vector<2x8x8xf32>
    %109 = vector.shape_cast %100 : vector<16x8xf32> to vector<2x8x8xf32>
    %110 = vector.shape_cast %107 : vector<16x8xf32> to vector<2x8x8xf32>
    "tpu.trace_start"() <{level = 10 : i32, message = "bqd,bkd->bqk"}> : () -> ()
    %cst_51 = arith.constant dense<0.000000e+00> : vector<2x8x8xf32>
    %111 = tpu.matmul %108, %109, %cst_51 {dimension_numbers = #tpu.dot_dimension_numbers<[2], [2], [1], [1], [0, 0, 0, 1, 1, 1], [0], [0]>} : vector<2x8x8xf32>, vector<2x8x8xf32>, vector<2x8x8xf32> -> vector<2x8x8xf32>
    %cst_52 = arith.constant -1.000000e+09 : f32
    "tpu.trace_stop"() : () -> ()
    %112 = vector.broadcast %cst_52 : f32 to vector<2x8x8xf32>
    %113 = arith.select %13, %112, %111 : vector<2x8x8xi1>, vector<2x8x8xf32>
    %cst_53 = arith.constant dense<0xFF800000> : vector<2x8xf32>
    %114 = vector.multi_reduction <maximumf>, %113, %cst_53 [2] : vector<2x8x8xf32> to vector<2x8xf32>
    %115 = vector.shape_cast %114 : vector<2x8xf32> to vector<2x8x1xf32>
    %116 = vector.broadcast %115 : vector<2x8x1xf32> to vector<2x8x8xf32>
    %117 = arith.subf %113, %116 : vector<2x8x8xf32>
    %118 = math.exp %117 : vector<2x8x8xf32>
    %cst_54 = arith.constant dense<0.000000e+00> : vector<2x8xf32>
    %119 = vector.multi_reduction <add>, %118, %cst_54 [2] : vector<2x8x8xf32> to vector<2x8xf32>
    %120 = vector.shape_cast %119 : vector<2x8xf32> to vector<2x8x1xf32>
    %121 = vector.broadcast %120 : vector<2x8x1xf32> to vector<2x8x8xf32>
    %122 = arith.divf %118, %121 : vector<2x8x8xf32>
    "tpu.trace_start"() <{level = 10 : i32, message = "bqk,bkd->bqd"}> : () -> ()
    %cst_55 = arith.constant dense<0.000000e+00> : vector<2x8x8xf32>
    %123 = tpu.matmul %122, %110, %cst_55 {dimension_numbers = #tpu.dot_dimension_numbers<[2], [1], [1], [2], [0, 0, 0, 1, 1, 2], [0], [0]>} : vector<2x8x8xf32>, vector<2x8x8xf32>, vector<2x8x8xf32> -> vector<2x8x8xf32>
    "tpu.trace_stop"() : () -> ()
    %124 = vector.shape_cast %123 : vector<2x8x8xf32> to vector<16x8xf32>
    %125 = vector.extract_strided_slice %6 {offsets = [1, 0, 0], sizes = [1, 8, 32], strides = [1, 1, 1]} : vector<4x8x32xf32> to vector<1x8x32xf32>
    %126 = vector.shape_cast %125 : vector<1x8x32xf32> to vector<8x32xf32>
    %cst_56 = arith.constant dense<0.000000e+00> : vector<16x32xf32>
    %127 = tpu.matmul %124, %126, %cst_56 {dimension_numbers = #tpu.dot_dimension_numbers<[1], [0], [0], [1], [0, 0, 1, 1], [], []>} : vector<16x8xf32>, vector<8x32xf32>, vector<16x32xf32> -> vector<16x32xf32>
    %128 = arith.addf %84, %127 : vector<16x32xf32>
    %129 = vector.extract_strided_slice %4 {offsets = [0, 2, 0, 0], sizes = [1, 1, 32, 8], strides = [1, 1, 1, 1]} : vector<3x4x32x8xf32> to vector<1x1x32x8xf32>
    %130 = vector.shape_cast %129 : vector<1x1x32x8xf32> to vector<32x8xf32>
    %cst_57 = arith.constant dense<0.000000e+00> : vector<16x8xf32>
    %131 = tpu.matmul %39, %130, %cst_57 {dimension_numbers = #tpu.dot_dimension_numbers<[1], [0], [0], [1], [0, 0, 1, 1], [], []>} : vector<16x32xf32>, vector<32x8xf32>, vector<16x8xf32> -> vector<16x8xf32>
    %132 = vector.extract_strided_slice %5 {offsets = [0, 2, 0, 0], sizes = [1, 1, 1, 8], strides = [1, 1, 1, 1]} : vector<3x4x1x8xf32> to vector<1x1x1x8xf32>
    %133 = vector.shape_cast %132 : vector<1x1x1x8xf32> to vector<1x8xf32>
    %134 = vector.broadcast %133 : vector<1x8xf32> to vector<16x8xf32>
    %135 = arith.addf %131, %134 : vector<16x8xf32>
    %cst_58 = arith.constant 0.353553385 : f32
    %136 = vector.broadcast %cst_58 : f32 to vector<16x8xf32>
    %137 = arith.mulf %135, %136 : vector<16x8xf32>
    %138 = vector.extract_strided_slice %4 {offsets = [1, 2, 0, 0], sizes = [1, 1, 32, 8], strides = [1, 1, 1, 1]} : vector<3x4x32x8xf32> to vector<1x1x32x8xf32>
    %139 = vector.shape_cast %138 : vector<1x1x32x8xf32> to vector<32x8xf32>
    %cst_59 = arith.constant dense<0.000000e+00> : vector<16x8xf32>
    %140 = tpu.matmul %39, %139, %cst_59 {dimension_numbers = #tpu.dot_dimension_numbers<[1], [0], [0], [1], [0, 0, 1, 1], [], []>} : vector<16x32xf32>, vector<32x8xf32>, vector<16x8xf32> -> vector<16x8xf32>
    %141 = vector.extract_strided_slice %5 {offsets = [1, 2, 0, 0], sizes = [1, 1, 1, 8], strides = [1, 1, 1, 1]} : vector<3x4x1x8xf32> to vector<1x1x1x8xf32>
    %142 = vector.shape_cast %141 : vector<1x1x1x8xf32> to vector<1x8xf32>
    %143 = vector.broadcast %142 : vector<1x8xf32> to vector<16x8xf32>
    %144 = arith.addf %140, %143 : vector<16x8xf32>
    %145 = vector.extract_strided_slice %4 {offsets = [2, 2, 0, 0], sizes = [1, 1, 32, 8], strides = [1, 1, 1, 1]} : vector<3x4x32x8xf32> to vector<1x1x32x8xf32>
    %146 = vector.shape_cast %145 : vector<1x1x32x8xf32> to vector<32x8xf32>
    %cst_60 = arith.constant dense<0.000000e+00> : vector<16x8xf32>
    %147 = tpu.matmul %39, %146, %cst_60 {dimension_numbers = #tpu.dot_dimension_numbers<[1], [0], [0], [1], [0, 0, 1, 1], [], []>} : vector<16x32xf32>, vector<32x8xf32>, vector<16x8xf32> -> vector<16x8xf32>
    %148 = vector.extract_strided_slice %5 {offsets = [2, 2, 0, 0], sizes = [1, 1, 1, 8], strides = [1, 1, 1, 1]} : vector<3x4x1x8xf32> to vector<1x1x1x8xf32>
    %149 = vector.shape_cast %148 : vector<1x1x1x8xf32> to vector<1x8xf32>
    %150 = vector.broadcast %149 : vector<1x8xf32> to vector<16x8xf32>
    %151 = arith.addf %147, %150 : vector<16x8xf32>
    %152 = vector.shape_cast %137 : vector<16x8xf32> to vector<2x8x8xf32>
    %153 = vector.shape_cast %144 : vector<16x8xf32> to vector<2x8x8xf32>
    %154 = vector.shape_cast %151 : vector<16x8xf32> to vector<2x8x8xf32>
    "tpu.trace_start"() <{level = 10 : i32, message = "bqd,bkd->bqk"}> : () -> ()
    %cst_61 = arith.constant dense<0.000000e+00> : vector<2x8x8xf32>
    %155 = tpu.matmul %152, %153, %cst_61 {dimension_numbers = #tpu.dot_dimension_numbers<[2], [2], [1], [1], [0, 0, 0, 1, 1, 1], [0], [0]>} : vector<2x8x8xf32>, vector<2x8x8xf32>, vector<2x8x8xf32> -> vector<2x8x8xf32>
    %cst_62 = arith.constant -1.000000e+09 : f32
    "tpu.trace_stop"() : () -> ()
    %156 = vector.broadcast %cst_62 : f32 to vector<2x8x8xf32>
    %157 = arith.select %13, %156, %155 : vector<2x8x8xi1>, vector<2x8x8xf32>
    %cst_63 = arith.constant dense<0xFF800000> : vector<2x8xf32>
    %158 = vector.multi_reduction <maximumf>, %157, %cst_63 [2] : vector<2x8x8xf32> to vector<2x8xf32>
    %159 = vector.shape_cast %158 : vector<2x8xf32> to vector<2x8x1xf32>
    %160 = vector.broadcast %159 : vector<2x8x1xf32> to vector<2x8x8xf32>
    %161 = arith.subf %157, %160 : vector<2x8x8xf32>
    %162 = math.exp %161 : vector<2x8x8xf32>
    %cst_64 = arith.constant dense<0.000000e+00> : vector<2x8xf32>
    %163 = vector.multi_reduction <add>, %162, %cst_64 [2] : vector<2x8x8xf32> to vector<2x8xf32>
    %164 = vector.shape_cast %163 : vector<2x8xf32> to vector<2x8x1xf32>
    %165 = vector.broadcast %164 : vector<2x8x1xf32> to vector<2x8x8xf32>
    %166 = arith.divf %162, %165 : vector<2x8x8xf32>
    "tpu.trace_start"() <{level = 10 : i32, message = "bqk,bkd->bqd"}> : () -> ()
    %cst_65 = arith.constant dense<0.000000e+00> : vector<2x8x8xf32>
    %167 = tpu.matmul %166, %154, %cst_65 {dimension_numbers = #tpu.dot_dimension_numbers<[2], [1], [1], [2], [0, 0, 0, 1, 1, 2], [0], [0]>} : vector<2x8x8xf32>, vector<2x8x8xf32>, vector<2x8x8xf32> -> vector<2x8x8xf32>
    "tpu.trace_stop"() : () -> ()
    %168 = vector.shape_cast %167 : vector<2x8x8xf32> to vector<16x8xf32>
    %169 = vector.extract_strided_slice %6 {offsets = [2, 0, 0], sizes = [1, 8, 32], strides = [1, 1, 1]} : vector<4x8x32xf32> to vector<1x8x32xf32>
    %170 = vector.shape_cast %169 : vector<1x8x32xf32> to vector<8x32xf32>
    %cst_66 = arith.constant dense<0.000000e+00> : vector<16x32xf32>
    %171 = tpu.matmul %168, %170, %cst_66 {dimension_numbers = #tpu.dot_dimension_numbers<[1], [0], [0], [1], [0, 0, 1, 1], [], []>} : vector<16x8xf32>, vector<8x32xf32>, vector<16x32xf32> -> vector<16x32xf32>
    %172 = arith.addf %128, %171 : vector<16x32xf32>
    %173 = vector.extract_strided_slice %4 {offsets = [0, 3, 0, 0], sizes = [1, 1, 32, 8], strides = [1, 1, 1, 1]} : vector<3x4x32x8xf32> to vector<1x1x32x8xf32>
    %174 = vector.shape_cast %173 : vector<1x1x32x8xf32> to vector<32x8xf32>
    %cst_67 = arith.constant dense<0.000000e+00> : vector<16x8xf32>
    %175 = tpu.matmul %39, %174, %cst_67 {dimension_numbers = #tpu.dot_dimension_numbers<[1], [0], [0], [1], [0, 0, 1, 1], [], []>} : vector<16x32xf32>, vector<32x8xf32>, vector<16x8xf32> -> vector<16x8xf32>
    %176 = vector.extract_strided_slice %5 {offsets = [0, 3, 0, 0], sizes = [1, 1, 1, 8], strides = [1, 1, 1, 1]} : vector<3x4x1x8xf32> to vector<1x1x1x8xf32>
    %177 = vector.shape_cast %176 : vector<1x1x1x8xf32> to vector<1x8xf32>
    %178 = vector.broadcast %177 : vector<1x8xf32> to vector<16x8xf32>
    %179 = arith.addf %175, %178 : vector<16x8xf32>
    %cst_68 = arith.constant 0.353553385 : f32
    %180 = vector.broadcast %cst_68 : f32 to vector<16x8xf32>
    %181 = arith.mulf %179, %180 : vector<16x8xf32>
    %182 = vector.extract_strided_slice %4 {offsets = [1, 3, 0, 0], sizes = [1, 1, 32, 8], strides = [1, 1, 1, 1]} : vector<3x4x32x8xf32> to vector<1x1x32x8xf32>
    %183 = vector.shape_cast %182 : vector<1x1x32x8xf32> to vector<32x8xf32>
    %cst_69 = arith.constant dense<0.000000e+00> : vector<16x8xf32>
    %184 = tpu.matmul %39, %183, %cst_69 {dimension_numbers = #tpu.dot_dimension_numbers<[1], [0], [0], [1], [0, 0, 1, 1], [], []>} : vector<16x32xf32>, vector<32x8xf32>, vector<16x8xf32> -> vector<16x8xf32>
    %185 = vector.extract_strided_slice %5 {offsets = [1, 3, 0, 0], sizes = [1, 1, 1, 8], strides = [1, 1, 1, 1]} : vector<3x4x1x8xf32> to vector<1x1x1x8xf32>
    %186 = vector.shape_cast %185 : vector<1x1x1x8xf32> to vector<1x8xf32>
    %187 = vector.broadcast %186 : vector<1x8xf32> to vector<16x8xf32>
    %188 = arith.addf %184, %187 : vector<16x8xf32>
    %189 = vector.extract_strided_slice %4 {offsets = [2, 3, 0, 0], sizes = [1, 1, 32, 8], strides = [1, 1, 1, 1]} : vector<3x4x32x8xf32> to vector<1x1x32x8xf32>
    %190 = vector.shape_cast %189 : vector<1x1x32x8xf32> to vector<32x8xf32>
    %cst_70 = arith.constant dense<0.000000e+00> : vector<16x8xf32>
    %191 = tpu.matmul %39, %190, %cst_70 {dimension_numbers = #tpu.dot_dimension_numbers<[1], [0], [0], [1], [0, 0, 1, 1], [], []>} : vector<16x32xf32>, vector<32x8xf32>, vector<16x8xf32> -> vector<16x8xf32>
    %192 = vector.extract_strided_slice %5 {offsets = [2, 3, 0, 0], sizes = [1, 1, 1, 8], strides = [1, 1, 1, 1]} : vector<3x4x1x8xf32> to vector<1x1x1x8xf32>
    %193 = vector.shape_cast %192 : vector<1x1x1x8xf32> to vector<1x8xf32>
    %194 = vector.broadcast %193 : vector<1x8xf32> to vector<16x8xf32>
    %195 = arith.addf %191, %194 : vector<16x8xf32>
    %196 = vector.shape_cast %181 : vector<16x8xf32> to vector<2x8x8xf32>
    %197 = vector.shape_cast %188 : vector<16x8xf32> to vector<2x8x8xf32>
    %198 = vector.shape_cast %195 : vector<16x8xf32> to vector<2x8x8xf32>
    "tpu.trace_start"() <{level = 10 : i32, message = "bqd,bkd->bqk"}> : () -> ()
    %cst_71 = arith.constant dense<0.000000e+00> : vector<2x8x8xf32>
    %199 = tpu.matmul %196, %197, %cst_71 {dimension_numbers = #tpu.dot_dimension_numbers<[2], [2], [1], [1], [0, 0, 0, 1, 1, 1], [0], [0]>} : vector<2x8x8xf32>, vector<2x8x8xf32>, vector<2x8x8xf32> -> vector<2x8x8xf32>
    %cst_72 = arith.constant -1.000000e+09 : f32
    "tpu.trace_stop"() : () -> ()
    %200 = vector.broadcast %cst_72 : f32 to vector<2x8x8xf32>
    %201 = arith.select %13, %200, %199 : vector<2x8x8xi1>, vector<2x8x8xf32>
    %cst_73 = arith.constant dense<0xFF800000> : vector<2x8xf32>
    %202 = vector.multi_reduction <maximumf>, %201, %cst_73 [2] : vector<2x8x8xf32> to vector<2x8xf32>
    %203 = vector.shape_cast %202 : vector<2x8xf32> to vector<2x8x1xf32>
    %204 = vector.broadcast %203 : vector<2x8x1xf32> to vector<2x8x8xf32>
    %205 = arith.subf %201, %204 : vector<2x8x8xf32>
    %206 = math.exp %205 : vector<2x8x8xf32>
    %cst_74 = arith.constant dense<0.000000e+00> : vector<2x8xf32>
    %207 = vector.multi_reduction <add>, %206, %cst_74 [2] : vector<2x8x8xf32> to vector<2x8xf32>
    %208 = vector.shape_cast %207 : vector<2x8xf32> to vector<2x8x1xf32>
    %209 = vector.broadcast %208 : vector<2x8x1xf32> to vector<2x8x8xf32>
    %210 = arith.divf %206, %209 : vector<2x8x8xf32>
    "tpu.trace_start"() <{level = 10 : i32, message = "bqk,bkd->bqd"}> : () -> ()
    %cst_75 = arith.constant dense<0.000000e+00> : vector<2x8x8xf32>
    %211 = tpu.matmul %210, %198, %cst_75 {dimension_numbers = #tpu.dot_dimension_numbers<[2], [1], [1], [2], [0, 0, 0, 1, 1, 2], [0], [0]>} : vector<2x8x8xf32>, vector<2x8x8xf32>, vector<2x8x8xf32> -> vector<2x8x8xf32>
    "tpu.trace_stop"() : () -> ()
    %212 = vector.shape_cast %211 : vector<2x8x8xf32> to vector<16x8xf32>
    %213 = vector.extract_strided_slice %6 {offsets = [3, 0, 0], sizes = [1, 8, 32], strides = [1, 1, 1]} : vector<4x8x32xf32> to vector<1x8x32xf32>
    %214 = vector.shape_cast %213 : vector<1x8x32xf32> to vector<8x32xf32>
    %cst_76 = arith.constant dense<0.000000e+00> : vector<16x32xf32>
    %215 = tpu.matmul %212, %214, %cst_76 {dimension_numbers = #tpu.dot_dimension_numbers<[1], [0], [0], [1], [0, 0, 1, 1], [], []>} : vector<16x8xf32>, vector<8x32xf32>, vector<16x32xf32> -> vector<16x32xf32>
    %216 = arith.addf %172, %215 : vector<16x32xf32>
    %217 = arith.addf %0, %216 : vector<16x32xf32>
    %218 = vector.broadcast %7 : vector<1x32xf32> to vector<16x32xf32>
    %219 = arith.addf %217, %218 : vector<16x32xf32>
    %220 = vector.extract_strided_slice %2 {offsets = [1, 0, 0], sizes = [1, 1, 32], strides = [1, 1, 1]} : vector<2x1x32xf32> to vector<1x1x32xf32>
    %221 = vector.shape_cast %220 : vector<1x1x32xf32> to vector<1x32xf32>
    %222 = vector.extract_strided_slice %3 {offsets = [1, 0, 0], sizes = [1, 1, 32], strides = [1, 1, 1]} : vector<2x1x32xf32> to vector<1x1x32xf32>
    %223 = vector.shape_cast %222 : vector<1x1x32xf32> to vector<1x32xf32>
    %cst_77 = arith.constant dense<0.000000e+00> : vector<16xf32>
    %224 = vector.multi_reduction <add>, %219, %cst_77 [1] : vector<16x32xf32> to vector<16xf32>
    %225 = vector.shape_cast %224 : vector<16xf32> to vector<16x1xf32>
    %cst_78 = arith.constant 3.200000e+01 : f32
    %226 = vector.broadcast %cst_78 : f32 to vector<16x1xf32>
    %227 = arith.divf %225, %226 : vector<16x1xf32>
    %228 = vector.broadcast %227 : vector<16x1xf32> to vector<16x32xf32>
    %229 = arith.subf %219, %228 : vector<16x32xf32>
    %230 = arith.mulf %229, %229 : vector<16x32xf32>
    %cst_79 = arith.constant dense<0.000000e+00> : vector<16xf32>
    %231 = vector.multi_reduction <add>, %230, %cst_79 [1] : vector<16x32xf32> to vector<16xf32>
    %232 = vector.shape_cast %231 : vector<16xf32> to vector<16x1xf32>
    %cst_80 = arith.constant 3.100000e+01 : f32
    %233 = vector.broadcast %cst_80 : f32 to vector<16x1xf32>
    %234 = arith.divf %232, %233 : vector<16x1xf32>
    %235 = vector.broadcast %227 : vector<16x1xf32> to vector<16x32xf32>
    %236 = arith.subf %219, %235 : vector<16x32xf32>
    %237 = vector.broadcast %221 : vector<1x32xf32> to vector<16x32xf32>
    %238 = arith.mulf %237, %236 : vector<16x32xf32>
    %239 = math.sqrt %234 : vector<16x1xf32>
    %cst_81 = arith.constant 9.99999997E-7 : f32
    %240 = vector.broadcast %cst_81 : f32 to vector<16x1xf32>
    %241 = arith.addf %239, %240 : vector<16x1xf32>
    %242 = vector.broadcast %241 : vector<16x1xf32> to vector<16x32xf32>
    %243 = arith.divf %238, %242 : vector<16x32xf32>
    %244 = vector.broadcast %223 : vector<1x32xf32> to vector<16x32xf32>
    %245 = arith.addf %243, %244 : vector<16x32xf32>
    %cst_82 = arith.constant dense<0.000000e+00> : vector<16x64xf32>
    %246 = tpu.matmul %245, %8, %cst_82 {dimension_numbers = #tpu.dot_dimension_numbers<[1], [0], [0], [1], [0, 0, 1, 1], [], []>} : vector<16x32xf32>, vector<32x64xf32>, vector<16x64xf32> -> vector<16x64xf32>
    %247 = vector.broadcast %9 : vector<1x64xf32> to vector<16x64xf32>
    %248 = arith.addf %246, %247 : vector<16x64xf32>
    %cst_83 = arith.constant 0.000000e+00 : f32
    %249 = vector.broadcast %cst_83 : f32 to vector<16x64xf32>
    %250 = arith.maximumf %248, %249 : vector<16x64xf32>
    %cst_84 = arith.constant dense<0.000000e+00> : vector<16x32xf32>
    %251 = tpu.matmul %250, %10, %cst_84 {dimension_numbers = #tpu.dot_dimension_numbers<[1], [0], [0], [1], [0, 0, 1, 1], [], []>} : vector<16x64xf32>, vector<64x32xf32>, vector<16x32xf32> -> vector<16x32xf32>
    %252 = arith.addf %219, %251 : vector<16x32xf32>
    %253 = vector.broadcast %11 : vector<1x32xf32> to vector<16x32xf32>
    %254 = arith.addf %252, %253 : vector<16x32xf32>
    %c0_85 = arith.constant 0 : index
    %c0_86 = arith.constant 0 : index
    %255 = vector.load %arg12[%c0_85, %c0_86] : memref<16x32xf32, #tpu.memory_space<vmem>>, vector<16x32xf32>
    tpu.vector_store %arg12[%c0_85, %c0_86], %254 {strides = array<i32>} : memref<16x32xf32, #tpu.memory_space<vmem>>, vector<16x32xf32>,
    return
  }
}

</mosaic_0001>

<llo_original>
// kernel: encoder_layer.1
$region0: #{encoder_layer.1}
  #allocation0 [shape = 'u32[]', space=smem, size = 0x4, offset = 0x4, fixed_abs, tag = 'smem constant byte address 0x4 - core index']
  #allocation1 [shape = 'u32[72,128]{1,0:T(1,128)}', space=vmem, size = 0x9000, scoped, tag = 'internal scratch']
  %s0 = inlined_call_operand.vmem [shape: f32[16,32], index: 0, kind: input, shape index: {}]
  %s1 = inlined_call_operand.vmem [shape: f32[2,8,8], index: 1, kind: input, shape index: {}]
  %s2 = inlined_call_operand.vmem [shape: f32[2,1,32], index: 2, kind: input, shape index: {}]
  %s3 = inlined_call_operand.vmem [shape: f32[2,1,32], index: 3, kind: input, shape index: {}]
  %s4 = inlined_call_operand.vmem [shape: f32[3,4,32,8], index: 4, kind: input, shape index: {}]
  %s5 = inlined_call_operand.vmem [shape: f32[3,4,1,8], index: 5, kind: input, shape index: {}]
  %s6 = inlined_call_operand.vmem [shape: f32[4,8,32], index: 6, kind: input, shape index: {}]
  %s7 = inlined_call_operand.vmem [shape: f32[1,32], index: 7, kind: input, shape index: {}]
  %s8 = inlined_call_operand.vmem [shape: f32[32,64], index: 8, kind: input, shape index: {}]
  %s9 = inlined_call_operand.vmem [shape: f32[1,64], index: 9, kind: input, shape index: {}]
  %s10 = inlined_call_operand.vmem [shape: f32[64,32], index: 10, kind: input, shape index: {}]
  %s11 = inlined_call_operand.vmem [shape: f32[1,32], index: 11, kind: input, shape index: {}]
  %s12 = inlined_call_operand.hbm [shape: f32[16,32], index: 12, kind: output, shape index: {}]
  %s13 = sld [smem:[#allocation0]]
  $region58: #{encoder_layer.1} parent=0
    _
  %s15 = ssub.s32 1, %s13
  %s16 = scalar_select 0, %s15, %s13
  $region1: #{encoder_layer.1} parent=0
    #allocation2 [shape = 'u8[8192]{0}', space=vmem, size = 0x2000, scoped, tag = 'output window, operand 0, single buffered']
    #allocation3 [shape = 's32[1]{0}', space=sflag, size = 0x4, scoped, tag = 'scoped memory for encoder_layer.1']
    %17 = vsyncpa [#allocation3], 0
    // Predicated region
    $region2: #{encoder_layer.1} parent=1 // pred_check
      _
    $region3: #{encoder_layer.1} parent=1 // pred_check_branch
      %19 = sbr.rel (0) target = $region5
    $region4: #{encoder_layer.1} parent=1 // pred_region
      _
    $region5: #{encoder_layer.1} parent=1 // pred_fallthru
      _
    // Predicated region
    $region6: #{encoder_layer.1} parent=1 // pred_check
      _
    $region7: #{encoder_layer.1} parent=1 // pred_check_branch
      %21 = sbr.rel (0) target = $region9
    $region8: #{encoder_layer.1} parent=1 // pred_region
      _
    $region9: #{encoder_layer.1} parent=1 // pred_fallthru
      _
    // Predicated region
    $region10: #{encoder_layer.1} parent=1 // pred_check
      _
    $region11: #{encoder_layer.1} parent=1 // pred_check_branch
      %23 = sbr.rel (0) target = $region13
    $region12: #{encoder_layer.1} parent=1 // pred_region
      _
    $region13: #{encoder_layer.1} parent=1 // pred_fallthru
      _
    // Predicated region
    $region14: #{encoder_layer.1} parent=1 // pred_check
      _
    $region15: #{encoder_layer.1} parent=1 // pred_check_branch
      %25 = sbr.rel (0) target = $region17
    $region16: #{encoder_layer.1} parent=1 // pred_region
      _
    $region17: #{encoder_layer.1} parent=1 // pred_fallthru
      _
    // Predicated region
    $region18: #{encoder_layer.1} parent=1 // pred_check
      _
    $region19: #{encoder_layer.1} parent=1 // pred_check_branch
      %27 = sbr.rel (0) target = $region21
    $region20: #{encoder_layer.1} parent=1 // pred_region
      _
    $region21: #{encoder_layer.1} parent=1 // pred_fallthru
      _
    // Predicated region
    $region22: #{encoder_layer.1} parent=1 // pred_check
      _
    $region23: #{encoder_layer.1} parent=1 // pred_check_branch
      %29 = sbr.rel (0) target = $region25
    $region24: #{encoder_layer.1} parent=1 // pred_region
      _
    $region25: #{encoder_layer.1} parent=1 // pred_fallthru
      _
    // Predicated region
    $region26: #{encoder_layer.1} parent=1 // pred_check
      _
    $region27: #{encoder_layer.1} parent=1 // pred_check_branch
      %31 = sbr.rel (0) target = $region29
    $region28: #{encoder_layer.1} parent=1 // pred_region
      _
    $region29: #{encoder_layer.1} parent=1 // pred_fallthru
      _
    // Predicated region
    $region30: #{encoder_layer.1} parent=1 // pred_check
      _
    $region31: #{encoder_layer.1} parent=1 // pred_check_branch
      %33 = sbr.rel (0) target = $region33
    $region32: #{encoder_layer.1} parent=1 // pred_region
      _
    $region33: #{encoder_layer.1} parent=1 // pred_fallthru
      _
    // Predicated region
    $region34: #{encoder_layer.1} parent=1 // pred_check
      _
    $region35: #{encoder_layer.1} parent=1 // pred_check_branch
      %35 = sbr.rel (0) target = $region37
    $region36: #{encoder_layer.1} parent=1 // pred_region
      _
    $region37: #{encoder_layer.1} parent=1 // pred_fallthru
      _
    // Predicated region
    $region38: #{encoder_layer.1} parent=1 // pred_check
      _
    $region39: #{encoder_layer.1} parent=1 // pred_check_branch
      %37 = sbr.rel (0) target = $region41
    $region40: #{encoder_layer.1} parent=1 // pred_region
      _
    $region41: #{encoder_layer.1} parent=1 // pred_fallthru
      _
    // Predicated region
    $region42: #{encoder_layer.1} parent=1 // pred_check
      _
    $region43: #{encoder_layer.1} parent=1 // pred_check_branch
      %39 = sbr.rel (0) target = $region45
    $region44: #{encoder_layer.1} parent=1 // pred_region
      _
    $region45: #{encoder_layer.1} parent=1 // pred_fallthru
      _
    // Predicated region
    $region46: #{encoder_layer.1} parent=1 // pred_check
      _
    $region47: #{encoder_layer.1} parent=1 // pred_check_branch
      %41 = sbr.rel (0) target = $region49
    $region48: #{encoder_layer.1} parent=1 // pred_region
      _
    $region49: #{encoder_layer.1} parent=1 // pred_fallthru
      _
    %v42 = vld [vmem:[%s0] sm:$0xff]
    %v43 = vld [vmem:[%s0 + $0x8] sm:$0xff]
    %v44 = vld [vmem:[%s1] sm:$0xff]
    %v45 = vld [vmem:[%s1 + $0x8] sm:$0xff]
    %v46 = vld [vmem:[%s2] sm:$0x1]
    %v47 = vld [vmem:[%s2 + $0x1] sm:$0x1]
    %v48 = vld [vmem:[%s3] sm:$0x1]
    %v49 = vld [vmem:[%s3 + $0x1] sm:$0x1]
    %v50 = vld [vmem:[%s4] sm:$0xff]
    %v51 = vld [vmem:[%s4 + $0x8] sm:$0xff]
    %v52 = vld [vmem:[%s4 + $0x10] sm:$0xff]
    %v53 = vld [vmem:[%s4 + $0x18] sm:$0xff]
    %v54 = vld [vmem:[%s4 + $0x20] sm:$0xff]
    %v55 = vld [vmem:[%s4 + $0x28] sm:$0xff]
    %v56 = vld [vmem:[%s4 + $0x30] sm:$0xff]
    %v57 = vld [vmem:[%s4 + $0x38] sm:$0xff]
    %v58 = vld [vmem:[%s4 + $0x40] sm:$0xff]
    %v59 = vld [vmem:[%s4 + $0x48] sm:$0xff]
    %v60 = vld [vmem:[%s4 + $0x50] sm:$0xff]
    %v61 = vld [vmem:[%s4 + $0x58] sm:$0xff]
    %v62 = vld [vmem:[%s4 + $0x60] sm:$0xff]
    %v63 = vld [vmem:[%s4 + $0x68] sm:$0xff]
    %v64 = vld [vmem:[%s4 + $0x70] sm:$0xff]
    %v65 = vld [vmem:[%s4 + $0x78] sm:$0xff]
    %v66 = vld [vmem:[%s4 + $0x80] sm:$0xff]
    %v67 = vld [vmem:[%s4 + $0x88] sm:$0xff]
    %v68 = vld [vmem:[%s4 + $0x90] sm:$0xff]
    %v69 = vld [vmem:[%s4 + $0x98] sm:$0xff]
    %v70 = vld [vmem:[%s4 + $0xa0] sm:$0xff]
    %v71 = vld [vmem:[%s4 + $0xa8] sm:$0xff]
    %v72 = vld [vmem:[%s4 + $0xb0] sm:$0xff]
    %v73 = vld [vmem:[%s4 + $0xb8] sm:$0xff]
    %v74 = vld [vmem:[%s4 + $0xc0] sm:$0xff]
    %v75 = vld [vmem:[%s4 + $0xc8] sm:$0xff]
    %v76 = vld [vmem:[%s4 + $0xd0] sm:$0xff]
    %v77 = vld [vmem:[%s4 + $0xd8] sm:$0xff]
    %v78 = vld [vmem:[%s4 + $0xe0] sm:$0xff]
    %v79 = vld [vmem:[%s4 + $0xe8] sm:$0xff]
    %v80 = vld [vmem:[%s4 + $0xf0] sm:$0xff]
    %v81 = vld [vmem:[%s4 + $0xf8] sm:$0xff]
    %v82 = vld [vmem:[%s4 + $0x100] sm:$0xff]
    %v83 = vld [vmem:[%s4 + $0x108] sm:$0xff]
    %v84 = vld [vmem:[%s4 + $0x110] sm:$0xff]
    %v85 = vld [vmem:[%s4 + $0x118] sm:$0xff]
    %v86 = vld [vmem:[%s4 + $0x120] sm:$0xff]
    %v87 = vld [vmem:[%s4 + $0x128] sm:$0xff]
    %v88 = vld [vmem:[%s4 + $0x130] sm:$0xff]
    %v89 = vld [vmem:[%s4 + $0x138] sm:$0xff]
    %v90 = vld [vmem:[%s4 + $0x140] sm:$0xff]
    %v91 = vld [vmem:[%s4 + $0x148] sm:$0xff]
    %v92 = vld [vmem:[%s4 + $0x150] sm:$0xff]
    %v93 = vld [vmem:[%s4 + $0x158] sm:$0xff]
    %v94 = vld [vmem:[%s4 + $0x160] sm:$0xff]
    %v95 = vld [vmem:[%s4 + $0x168] sm:$0xff]
    %v96 = vld [vmem:[%s4 + $0x170] sm:$0xff]
    %v97 = vld [vmem:[%s4 + $0x178] sm:$0xff]
    %v98 = vld [vmem:[%s5] sm:$0x1]
    %v99 = vld [vmem:[%s5 + $0x1] sm:$0x1]
    %v100 = vld [vmem:[%s5 + $0x2] sm:$0x1]
    %v101 = vld [vmem:[%s5 + $0x3] sm:$0x1]
    %v102 = vld [vmem:[%s5 + $0x4] sm:$0x1]
    %v103 = vld [vmem:[%s5 + $0x5] sm:$0x1]
    %v104 = vld [vmem:[%s5 + $0x6] sm:$0x1]
    %v105 = vld [vmem:[%s5 + $0x7] sm:$0x1]
    %v106 = vld [vmem:[%s5 + $0x8] sm:$0x1]
    %v107 = vld [vmem:[%s5 + $0x9] sm:$0x1]
    %v108 = vld [vmem:[%s5 + $0xa] sm:$0x1]
    %v109 = vld [vmem:[%s5 + $0xb] sm:$0x1]
    %v110 = vld [vmem:[%s6] sm:$0xff]
    %v111 = vld [vmem:[%s6 + $0x8] sm:$0xff]
    %v112 = vld [vmem:[%s6 + $0x10] sm:$0xff]
    %v113 = vld [vmem:[%s6 + $0x18] sm:$0xff]
    %v114 = vld [vmem:[%s7] sm:$0x1]
    %v115 = vld [vmem:[%s8] sm:$0xff]
    %v116 = vld [vmem:[%s8 + $0x8] sm:$0xff]
    %v117 = vld [vmem:[%s8 + $0x10] sm:$0xff]
    %v118 = vld [vmem:[%s8 + $0x18] sm:$0xff]
    %v119 = vld [vmem:[%s9] sm:$0x1]
    %v120 = vld [vmem:[%s10] sm:$0xff]
    %v121 = vld [vmem:[%s10 + $0x8] sm:$0xff]
    %v122 = vld [vmem:[%s10 + $0x10] sm:$0xff]
    %v123 = vld [vmem:[%s10 + $0x18] sm:$0xff]
    %v124 = vld [vmem:[%s10 + $0x20] sm:$0xff]
    %v125 = vld [vmem:[%s10 + $0x28] sm:$0xff]
    %v126 = vld [vmem:[%s10 + $0x30] sm:$0xff]
    %v127 = vld [vmem:[%s10 + $0x38] sm:$0xff]
    %v128 = vld [vmem:[%s11] sm:$0x1]
    %vm129 = vcmp.eq.f32.partialorder %v44, 0.0
    %vm130 = vcmp.eq.f32.partialorder %v45, 0.0
    %vm131 = vcmask 261120
    %v132 = vsel %vm131, %v42, 0.0
    %133 = vadd.xlane.f32.xlu0 %v132
    %v134 = vpop.xlane.xlu0 %133
    %v135 = vsel %vm131, %v43, 0.0
    %136 = vadd.xlane.f32.xlu0 %v135
    %v137 = vpop.xlane.xlu0 %136
    %v138 = vrcp.pop 32.0
    %v139 = vmul.f32 32.0, %v138
    %v140 = vsub.f32 1.0, %v139
    %v141 = vmul.f32 %v138, %v140
    %v142 = vadd.f32 %v138, %v141
    %vm143 = vweird.f32 %v138
    %v144 = vsel %vm143, %v138, %v142
    %v145 = vmul.f32 %v134, %v144
    %v146 = vmul.f32 %v137, %v144
    %v147 = vsub.f32 %v42, %v145
    %v148 = vsub.f32 %v43, %v146
    %v149 = vmul.f32 %v147, %v147
    %v150 = vmul.f32 %v148, %v148
    %v151 = vsel %vm131, %v149, 0.0
    %152 = vadd.xlane.f32.xlu0 %v151
    %v153 = vpop.xlane.xlu0 %152
    %v154 = vsel %vm131, %v150, 0.0
    %155 = vadd.xlane.f32.xlu0 %v154
    %v156 = vpop.xlane.xlu0 %155
    %v157 = vrcp.pop 31.0
    %v158 = vmul.f32 31.0, %v157
    %v159 = vsub.f32 1.0, %v158
    %v160 = vmul.f32 %v157, %v159
    %v161 = vadd.f32 %v157, %v160
    %vm162 = vweird.f32 %v157
    %v163 = vsel %vm162, %v157, %v161
    %v164 = vmul.f32 %v153, %v163
    %v165 = vmul.f32 %v156, %v163
    %v167 = vperm.slane %v46, 0
    %v169 = vmul.f32 %v167, %v147
    %v170 = vmul.f32 %v167, %v148
    %v171 = vrsqrt.pop %v164
    %v172 = vmul.f32 %v171, %v164
    %v173 = vmul.f32 %v172, %v171
    %v174 = vmul.f32 0.5, %v173
    %v175 = vsub.f32 1.5, %v174
    %v176 = vmul.f32 %v171, %v175
    %v177 = vmul.f32 %v164, %v176
    %vm178 = vcmp.eq.f32.partialorder %v164, inf
    %v179 = vsel %vm178, %v164, %v177
    %vm180 = vcmp.eq.f32.partialorder %v164, 0.0
    %v181 = vand.u32 %v164, 2147483648
    %v182 = vsel %vm180, %v181, %v179
    %v183 = vrsqrt.pop %v165
    %v184 = vmul.f32 %v183, %v165
    %v185 = vmul.f32 %v184, %v183
    %v186 = vmul.f32 0.5, %v185
    %v187 = vsub.f32 1.5, %v186
    %v188 = vmul.f32 %v183, %v187
    %v189 = vmul.f32 %v165, %v188
    %vm190 = vcmp.eq.f32.partialorder %v165, inf
    %v191 = vsel %vm190, %v165, %v189
    %vm192 = vcmp.eq.f32.partialorder %v165, 0.0
    %v193 = vand.u32 %v165, 2147483648
    %v194 = vsel %vm192, %v193, %v191
    %v195 = vadd.f32 %v182, 1e-06
    %v196 = vadd.f32 %v194, 1e-06
    %v197 = vrcp.pop %v195
    %v198 = vmul.f32 %v195, %v197
    %v199 = vsub.f32 1.0, %v198
    %v200 = vmul.f32 %v197, %v199
    %v201 = vadd.f32 %v197, %v200
    %vm202 = vweird.f32 %v195
    %vm203 = vweird.f32 %v197
    %vm204 = vmor %vm202, %vm203
    %v205 = vsel %vm204, %v197, %v201
    %v206 = vand.u32 2147483647, %v195
    %vm207 = vcmp.eq.f32.partialorder %v206, 8.507059e+37
    %v208 = vand.u32 %v195, 2147483648
    %v209 = vor.u32 1.1754944e-38, %v208
    %v210 = vsel %vm207, %v209, %v205
    %v211 = vmul.f32 %v169, %v210
    %v212 = vrcp.pop %v196
    %v213 = vmul.f32 %v196, %v212
    %v214 = vsub.f32 1.0, %v213
    %v215 = vmul.f32 %v212, %v214
    %v216 = vadd.f32 %v212, %v215
    %vm217 = vweird.f32 %v196
    %vm218 = vweird.f32 %v212
    %vm219 = vmor %vm217, %vm218
    %v220 = vsel %vm219, %v212, %v216
    %v221 = vand.u32 2147483647, %v196
    %vm222 = vcmp.eq.f32.partialorder %v221, 8.507059e+37
    %v223 = vand.u32 %v196, 2147483648
    %v224 = vor.u32 1.1754944e-38, %v223
    %v225 = vsel %vm222, %v224, %v220
    %v226 = vmul.f32 %v170, %v225
    %v228 = vperm.slane %v48, 0
    %v230 = vadd.f32 %v211, %v228
    %v231 = vadd.f32 %v226, %v228
    %v233 = vperm.slane %v98, 0
    %v236 = vsel %vm131, %v230, 0
    %v239 = vsel %vm131, %v231, 0
    %241 = vmatpush.msra.mxu0 0.0
    %242 = vmatpush.msra.mxu0 0.0
    %243 = vmatpush.msra.mxu0 0.0
    %244 = vmatpush.msra.mxu0 0.0
    %245 = vmatpush.msra.mxu0 0.0
    %246 = vmatpush.msra.mxu0 0.0
    %247 = vmatpush.msra.mxu0 0.0
    %248 = vmatpush.msra.mxu0 0.0
    %249 = vmatpush.msra.mxu0 0.0
    %250 = vmatpush.msra.mxu0 0.0
    %251 = vmatpush.msra.mxu0 0.0
    %252 = vmatpush.msra.mxu0 0.0
    %253 = vmatpush.msra.mxu0 %v53
    %254 = vmatpush.msra.mxu0 %v52
    %255 = vmatpush.msra.mxu0 %v51
    %256 = vmatpush.msra.mxu0 %v50
    %257 = vmatmul.f32.gmra.mxu0 %v236
    %v258 = vpop.f32.mrf.mxu0
    %v259 = vadd.f32 %v233, %v258
    %260 = vmatmul.f32.gmra.mxu0 %v239
    %v261 = vpop.f32.mrf.mxu0
    %v262 = vadd.f32 %v233, %v261
    %263 = vdwg.mxu0
    %v264 = vmul.f32 %v259, 0.35355338
    %v265 = vmul.f32 %v262, 0.35355338
    %v267 = vperm.slane %v102, 0
    %269 = vmatpush.msra.mxu0 0.0
    %270 = vmatpush.msra.mxu0 0.0
    %271 = vmatpush.msra.mxu0 0.0
    %272 = vmatpush.msra.mxu0 0.0
    %273 = vmatpush.msra.mxu0 0.0
    %274 = vmatpush.msra.mxu0 0.0
    %275 = vmatpush.msra.mxu0 0.0
    %276 = vmatpush.msra.mxu0 0.0
    %277 = vmatpush.msra.mxu0 0.0
    %278 = vmatpush.msra.mxu0 0.0
    %279 = vmatpush.msra.mxu0 0.0
    %280 = vmatpush.msra.mxu0 0.0
    %281 = vmatpush.msra.mxu0 %v69
    %282 = vmatpush.msra.mxu0 %v68
    %283 = vmatpush.msra.mxu0 %v67
    %284 = vmatpush.msra.mxu0 %v66
    %285 = vmatmul.f32.gmra.mxu0 %v236
    %v286 = vpop.f32.mrf.mxu0
    %v287 = vadd.f32 %v267, %v286
    %288 = vmatmul.f32.gmra.mxu0 %v239
    %v289 = vpop.f32.mrf.mxu0
    %v290 = vadd.f32 %v267, %v289
    %291 = vdwg.mxu0
    %v293 = vperm.slane %v106, 0
    %295 = vmatpush.msra.mxu0 0.0
    %296 = vmatpush.msra.mxu0 0.0
    %297 = vmatpush.msra.mxu0 0.0
    %298 = vmatpush.msra.mxu0 0.0
    %299 = vmatpush.msra.mxu0 0.0
    %300 = vmatpush.msra.mxu0 0.0
    %301 = vmatpush.msra.mxu0 0.0
    %302 = vmatpush.msra.mxu0 0.0
    %303 = vmatpush.msra.mxu0 0.0
    %304 = vmatpush.msra.mxu0 0.0
    %305 = vmatpush.msra.mxu0 0.0
    %306 = vmatpush.msra.mxu0 0.0
    %307 = vmatpush.msra.mxu0 %v85
    %308 = vmatpush.msra.mxu0 %v84
    %309 = vmatpush.msra.mxu0 %v83
    %310 = vmatpush.msra.mxu0 %v82
    %311 = vmatmul.f32.gmra.mxu0 %v236
    %v312 = vpop.f32.mrf.mxu0
    %v313 = vadd.f32 %v293, %v312
    %314 = vmatmul.f32.gmra.mxu0 %v239
    %v315 = vpop.f32.mrf.mxu0
    %v316 = vadd.f32 %v293, %v315
    %317 = vdwg.mxu0
    %vm318 = vcmask 64512
    %v320 = vsel %vm318, %v264, 0
    %v323 = vsel %vm318, %v287, 0
    %325 = vmatpush.xpose.msra.mxu0 0.0
    %326 = vmatpush.xpose.msra.mxu0 0.0
    %327 = vmatpush.xpose.msra.mxu0 0.0
    %328 = vmatpush.xpose.msra.mxu0 0.0
    %329 = vmatpush.xpose.msra.mxu0 0.0
    %330 = vmatpush.xpose.msra.mxu0 0.0
    %331 = vmatpush.xpose.msra.mxu0 0.0
    %332 = vmatpush.xpose.msra.mxu0 0.0
    %333 = vmatpush.xpose.msra.mxu0 0.0
    %334 = vmatpush.xpose.msra.mxu0 0.0
    %335 = vmatpush.xpose.msra.mxu0 0.0
    %336 = vmatpush.xpose.msra.mxu0 0.0
    %337 = vmatpush.xpose.msra.mxu0 0.0
    %338 = vmatpush.xpose.msra.mxu0 0.0
    %339 = vmatpush.xpose.msra.mxu0 0.0
    %340 = vmatpush.xpose.msra.mxu0 %v323
    %341 = vmatmul.f32.gmra.mxu0 %v320
    %v342 = vpop.f32.mrf.mxu0
    %v343 = vadd.f32 0.0, %v342
    %344 = vdwg.mxu0
    %v346 = vsel %vm318, %v265, 0
    %v349 = vsel %vm318, %v290, 0
    %351 = vmatpush.xpose.msra.mxu0 0.0
    %352 = vmatpush.xpose.msra.mxu0 0.0
    %353 = vmatpush.xpose.msra.mxu0 0.0
    %354 = vmatpush.xpose.msra.mxu0 0.0
    %355 = vmatpush.xpose.msra.mxu0 0.0
    %356 = vmatpush.xpose.msra.mxu0 0.0
    %357 = vmatpush.xpose.msra.mxu0 0.0
    %358 = vmatpush.xpose.msra.mxu0 0.0
    %359 = vmatpush.xpose.msra.mxu0 0.0
    %360 = vmatpush.xpose.msra.mxu0 0.0
    %361 = vmatpush.xpose.msra.mxu0 0.0
    %362 = vmatpush.xpose.msra.mxu0 0.0
    %363 = vmatpush.xpose.msra.mxu0 0.0
    %364 = vmatpush.xpose.msra.mxu0 0.0
    %365 = vmatpush.xpose.msra.mxu0 0.0
    %366 = vmatpush.xpose.msra.mxu0 %v349
    %367 = vmatmul.f32.gmra.mxu0 %v346
    %v368 = vpop.f32.mrf.mxu0
    %v369 = vadd.f32 0.0, %v368
    %370 = vdwg.mxu0
    %v371 = vsel %vm129, -1e+09, %v343
    %v372 = vsel %vm130, -1e+09, %v369
    %v373 = vsel %vm318, %v371, -inf
    %374 = vmax.xlane.f32.xlu0 %v373
    %v375 = vpop.xlane.xlu0 %374
    %v376 = vsel %vm318, %v372, -inf
    %377 = vmax.xlane.f32.xlu0 %v376
    %v378 = vpop.xlane.xlu0 %377
    %v379 = vsub.f32 %v371, %v375
    %v380 = vsub.f32 %v372, %v378
    %v381 = vmul.f32 %v379, 1.442695
    %v382 = vpow.pop %v381
    %v383 = vmul.f32 %v380, 1.442695
    %v384 = vpow.pop %v383
    %v385 = vsel %vm318, %v382, 0.0
    %386 = vadd.xlane.f32.xlu0 %v385
    %v387 = vpop.xlane.xlu0 %386
    %v388 = vsel %vm318, %v384, 0.0
    %389 = vadd.xlane.f32.xlu0 %v388
    %v390 = vpop.xlane.xlu0 %389
    %v391 = vrcp.pop %v387
    %v392 = vmul.f32 %v387, %v391
    %v393 = vsub.f32 1.0, %v392
    %v394 = vmul.f32 %v391, %v393
    %v395 = vadd.f32 %v391, %v394
    %vm396 = vweird.f32 %v387
    %vm397 = vweird.f32 %v391
    %vm398 = vmor %vm396, %vm397
    %v399 = vsel %vm398, %v391, %v395
    %v400 = vand.u32 2147483647, %v387
    %vm401 = vcmp.eq.f32.partialorder %v400, 8.507059e+37
    %v402 = vand.u32 %v387, 2147483648
    %v403 = vor.u32 1.1754944e-38, %v402
    %v404 = vsel %vm401, %v403, %v399
    %v405 = vmul.f32 %v382, %v404
    %v406 = vrcp.pop %v390
    %v407 = vmul.f32 %v390, %v406
    %v408 = vsub.f32 1.0, %v407
    %v409 = vmul.f32 %v406, %v408
    %v410 = vadd.f32 %v406, %v409
    %vm411 = vweird.f32 %v390
    %vm412 = vweird.f32 %v406
    %vm413 = vmor %vm411, %vm412
    %v414 = vsel %vm413, %v406, %v410
    %v415 = vand.u32 2147483647, %v390
    %vm416 = vcmp.eq.f32.partialorder %v415, 8.507059e+37
    %v417 = vand.u32 %v390, 2147483648
    %v418 = vor.u32 1.1754944e-38, %v417
    %v419 = vsel %vm416, %v418, %v414
    %v420 = vmul.f32 %v384, %v419
    %v422 = vsel %vm318, %v405, 0
    %424 = vmatpush.msra.mxu0 0.0
    %425 = vmatpush.msra.mxu0 0.0
    %426 = vmatpush.msra.mxu0 0.0
    %427 = vmatpush.msra.mxu0 0.0
    %428 = vmatpush.msra.mxu0 0.0
    %429 = vmatpush.msra.mxu0 0.0
    %430 = vmatpush.msra.mxu0 0.0
    %431 = vmatpush.msra.mxu0 0.0
    %432 = vmatpush.msra.mxu0 0.0
    %433 = vmatpush.msra.mxu0 0.0
    %434 = vmatpush.msra.mxu0 0.0
    %435 = vmatpush.msra.mxu0 0.0
    %436 = vmatpush.msra.mxu0 0.0
    %437 = vmatpush.msra.mxu0 0.0
    %438 = vmatpush.msra.mxu0 0.0
    %439 = vmatpush.msra.mxu0 %v313
    %440 = vmatmul.f32.gmra.mxu0 %v422
    %v441 = vpop.f32.mrf.mxu0
    %v442 = vadd.f32 0.0, %v441
    %443 = vdwg.mxu0
    %v445 = vsel %vm318, %v420, 0
    %447 = vmatpush.msra.mxu0 0.0
    %448 = vmatpush.msra.mxu0 0.0
    %449 = vmatpush.msra.mxu0 0.0
    %450 = vmatpush.msra.mxu0 0.0
    %451 = vmatpush.msra.mxu0 0.0
    %452 = vmatpush.msra.mxu0 0.0
    %453 = vmatpush.msra.mxu0 0.0
    %454 = vmatpush.msra.mxu0 0.0
    %455 = vmatpush.msra.mxu0 0.0
    %456 = vmatpush.msra.mxu0 0.0
    %457 = vmatpush.msra.mxu0 0.0
    %458 = vmatpush.msra.mxu0 0.0
    %459 = vmatpush.msra.mxu0 0.0
    %460 = vmatpush.msra.mxu0 0.0
    %461 = vmatpush.msra.mxu0 0.0
    %462 = vmatpush.msra.mxu0 %v316
    %463 = vmatmul.f32.gmra.mxu0 %v445
    %v464 = vpop.f32.mrf.mxu0
    %v465 = vadd.f32 0.0, %v464
    %466 = vdwg.mxu0
    %v468 = vperm.slane %v99, 0
    %470 = vmatpush.msra.mxu0 0.0
    %471 = vmatpush.msra.mxu0 0.0
    %472 = vmatpush.msra.mxu0 0.0
    %473 = vmatpush.msra.mxu0 0.0
    %474 = vmatpush.msra.mxu0 0.0
    %475 = vmatpush.msra.mxu0 0.0
    %476 = vmatpush.msra.mxu0 0.0
    %477 = vmatpush.msra.mxu0 0.0
    %478 = vmatpush.msra.mxu0 0.0
    %479 = vmatpush.msra.mxu0 0.0
    %480 = vmatpush.msra.mxu0 0.0
    %481 = vmatpush.msra.mxu0 0.0
    %482 = vmatpush.msra.mxu0 %v57
    %483 = vmatpush.msra.mxu0 %v56
    %484 = vmatpush.msra.mxu0 %v55
    %485 = vmatpush.msra.mxu0 %v54
    %486 = vmatmul.f32.gmra.mxu0 %v236
    %v487 = vpop.f32.mrf.mxu0
    %v488 = vadd.f32 %v468, %v487
    %489 = vmatmul.f32.gmra.mxu0 %v239
    %v490 = vpop.f32.mrf.mxu0
    %v491 = vadd.f32 %v468, %v490
    %492 = vdwg.mxu0
    %v493 = vmul.f32 %v488, 0.35355338
    %v494 = vmul.f32 %v491, 0.35355338
    %v496 = vperm.slane %v103, 0
    %498 = vmatpush.msra.mxu0 0.0
    %499 = vmatpush.msra.mxu0 0.0
    %500 = vmatpush.msra.mxu0 0.0
    %501 = vmatpush.msra.mxu0 0.0
    %502 = vmatpush.msra.mxu0 0.0
    %503 = vmatpush.msra.mxu0 0.0
    %504 = vmatpush.msra.mxu0 0.0
    %505 = vmatpush.msra.mxu0 0.0
    %506 = vmatpush.msra.mxu0 0.0
    %507 = vmatpush.msra.mxu0 0.0
    %508 = vmatpush.msra.mxu0 0.0
    %509 = vmatpush.msra.mxu0 0.0
    %510 = vmatpush.msra.mxu0 %v73
    %511 = vmatpush.msra.mxu0 %v72
    %512 = vmatpush.msra.mxu0 %v71
    %513 = vmatpush.msra.mxu0 %v70
    %514 = vmatmul.f32.gmra.mxu0 %v236
    %v515 = vpop.f32.mrf.mxu0
    %v516 = vadd.f32 %v496, %v515
    %517 = vmatmul.f32.gmra.mxu0 %v239
    %v518 = vpop.f32.mrf.mxu0
    %v519 = vadd.f32 %v496, %v518
    %520 = vdwg.mxu0
    %v522 = vperm.slane %v107, 0
    %524 = vmatpush.msra.mxu0 0.0
    %525 = vmatpush.msra.mxu0 0.0
    %526 = vmatpush.msra.mxu0 0.0
    %527 = vmatpush.msra.mxu0 0.0
    %528 = vmatpush.msra.mxu0 0.0
    %529 = vmatpush.msra.mxu0 0.0
    %530 = vmatpush.msra.mxu0 0.0
    %531 = vmatpush.msra.mxu0 0.0
    %532 = vmatpush.msra.mxu0 0.0
    %533 = vmatpush.msra.mxu0 0.0
    %534 = vmatpush.msra.mxu0 0.0
    %535 = vmatpush.msra.mxu0 0.0
    %536 = vmatpush.msra.mxu0 %v89
    %537 = vmatpush.msra.mxu0 %v88
    %538 = vmatpush.msra.mxu0 %v87
    %539 = vmatpush.msra.mxu0 %v86
    %540 = vmatmul.f32.gmra.mxu0 %v236
    %v541 = vpop.f32.mrf.mxu0
    %v542 = vadd.f32 %v522, %v541
    %543 = vmatmul.f32.gmra.mxu0 %v239
    %v544 = vpop.f32.mrf.mxu0
    %v545 = vadd.f32 %v522, %v544
    %546 = vdwg.mxu0
    %v548 = vsel %vm318, %v493, 0
    %v551 = vsel %vm318, %v516, 0
    %553 = vmatpush.xpose.msra.mxu0 0.0
    %554 = vmatpush.xpose.msra.mxu0 0.0
    %555 = vmatpush.xpose.msra.mxu0 0.0
    %556 = vmatpush.xpose.msra.mxu0 0.0
    %557 = vmatpush.xpose.msra.mxu0 0.0
    %558 = vmatpush.xpose.msra.mxu0 0.0
    %559 = vmatpush.xpose.msra.mxu0 0.0
    %560 = vmatpush.xpose.msra.mxu0 0.0
    %561 = vmatpush.xpose.msra.mxu0 0.0
    %562 = vmatpush.xpose.msra.mxu0 0.0
    %563 = vmatpush.xpose.msra.mxu0 0.0
    %564 = vmatpush.xpose.msra.mxu0 0.0
    %565 = vmatpush.xpose.msra.mxu0 0.0
    %566 = vmatpush.xpose.msra.mxu0 0.0
    %567 = vmatpush.xpose.msra.mxu0 0.0
    %568 = vmatpush.xpose.msra.mxu0 %v551
    %569 = vmatmul.f32.gmra.mxu0 %v548
    %v570 = vpop.f32.mrf.mxu0
    %v571 = vadd.f32 0.0, %v570
    %572 = vdwg.mxu0
    %v574 = vsel %vm318, %v494, 0
    %v577 = vsel %vm318, %v519, 0
    %579 = vmatpush.xpose.msra.mxu0 0.0
    %580 = vmatpush.xpose.msra.mxu0 0.0
    %581 = vmatpush.xpose.msra.mxu0 0.0
    %582 = vmatpush.xpose.msra.mxu0 0.0
    %583 = vmatpush.xpose.msra.mxu0 0.0
    %584 = vmatpush.xpose.msra.mxu0 0.0
    %585 = vmatpush.xpose.msra.mxu0 0.0
    %586 = vmatpush.xpose.msra.mxu0 0.0
    %587 = vmatpush.xpose.msra.mxu0 0.0
    %588 = vmatpush.xpose.msra.mxu0 0.0
    %589 = vmatpush.xpose.msra.mxu0 0.0
    %590 = vmatpush.xpose.msra.mxu0 0.0
    %591 = vmatpush.xpose.msra.mxu0 0.0
    %592 = vmatpush.xpose.msra.mxu0 0.0
    %593 = vmatpush.xpose.msra.mxu0 0.0
    %594 = vmatpush.xpose.msra.mxu0 %v577
    %595 = vmatmul.f32.gmra.mxu0 %v574
    %v596 = vpop.f32.mrf.mxu0
    %v597 = vadd.f32 0.0, %v596
    %598 = vdwg.mxu0
    %v599 = vsel %vm129, -1e+09, %v571
    %v600 = vsel %vm130, -1e+09, %v597
    %v601 = vsel %vm318, %v599, -inf
    %602 = vmax.xlane.f32.xlu0 %v601
    %v603 = vpop.xlane.xlu0 %602
    %v604 = vsel %vm318, %v600, -inf
    %605 = vmax.xlane.f32.xlu0 %v604
    %v606 = vpop.xlane.xlu0 %605
    %v607 = vsub.f32 %v599, %v603
    %v608 = vsub.f32 %v600, %v606
    %v609 = vmul.f32 %v607, 1.442695
    %v610 = vpow.pop %v609
    %v611 = vmul.f32 %v608, 1.442695
    %v612 = vpow.pop %v611
    %v613 = vsel %vm318, %v610, 0.0
    %614 = vadd.xlane.f32.xlu0 %v613
    %v615 = vpop.xlane.xlu0 %614
    %v616 = vsel %vm318, %v612, 0.0
    %617 = vadd.xlane.f32.xlu0 %v616
    %v618 = vpop.xlane.xlu0 %617
    %v619 = vrcp.pop %v615
    %v620 = vmul.f32 %v615, %v619
    %v621 = vsub.f32 1.0, %v620
    %v622 = vmul.f32 %v619, %v621
    %v623 = vadd.f32 %v619, %v622
    %vm624 = vweird.f32 %v615
    %vm625 = vweird.f32 %v619
    %vm626 = vmor %vm624, %vm625
    %v627 = vsel %vm626, %v619, %v623
    %v628 = vand.u32 2147483647, %v615
    %vm629 = vcmp.eq.f32.partialorder %v628, 8.507059e+37
    %v630 = vand.u32 %v615, 2147483648
    %v631 = vor.u32 1.1754944e-38, %v630
    %v632 = vsel %vm629, %v631, %v627
    %v633 = vmul.f32 %v610, %v632
    %v634 = vrcp.pop %v618
    %v635 = vmul.f32 %v618, %v634
    %v636 = vsub.f32 1.0, %v635
    %v637 = vmul.f32 %v634, %v636
    %v638 = vadd.f32 %v634, %v637
    %vm639 = vweird.f32 %v618
    %vm640 = vweird.f32 %v634
    %vm641 = vmor %vm639, %vm640
    %v642 = vsel %vm641, %v634, %v638
    %v643 = vand.u32 2147483647, %v618
    %vm644 = vcmp.eq.f32.partialorder %v643, 8.507059e+37
    %v645 = vand.u32 %v618, 2147483648
    %v646 = vor.u32 1.1754944e-38, %v645
    %v647 = vsel %vm644, %v646, %v642
    %v648 = vmul.f32 %v612, %v647
    %v650 = vsel %vm318, %v633, 0
    %652 = vmatpush.msra.mxu0 0.0
    %653 = vmatpush.msra.mxu0 0.0
    %654 = vmatpush.msra.mxu0 0.0
    %655 = vmatpush.msra.mxu0 0.0
    %656 = vmatpush.msra.mxu0 0.0
    %657 = vmatpush.msra.mxu0 0.0
    %658 = vmatpush.msra.mxu0 0.0
    %659 = vmatpush.msra.mxu0 0.0
    %660 = vmatpush.msra.mxu0 0.0
    %661 = vmatpush.msra.mxu0 0.0
    %662 = vmatpush.msra.mxu0 0.0
    %663 = vmatpush.msra.mxu0 0.0
    %664 = vmatpush.msra.mxu0 0.0
    %665 = vmatpush.msra.mxu0 0.0
    %666 = vmatpush.msra.mxu0 0.0
    %667 = vmatpush.msra.mxu0 %v542
    %668 = vmatmul.f32.gmra.mxu0 %v650
    %v669 = vpop.f32.mrf.mxu0
    %v670 = vadd.f32 0.0, %v669
    %671 = vdwg.mxu0
    %v673 = vsel %vm318, %v648, 0
    %675 = vmatpush.msra.mxu0 0.0
    %676 = vmatpush.msra.mxu0 0.0
    %677 = vmatpush.msra.mxu0 0.0
    %678 = vmatpush.msra.mxu0 0.0
    %679 = vmatpush.msra.mxu0 0.0
    %680 = vmatpush.msra.mxu0 0.0
    %681 = vmatpush.msra.mxu0 0.0
    %682 = vmatpush.msra.mxu0 0.0
    %683 = vmatpush.msra.mxu0 0.0
    %684 = vmatpush.msra.mxu0 0.0
    %685 = vmatpush.msra.mxu0 0.0
    %686 = vmatpush.msra.mxu0 0.0
    %687 = vmatpush.msra.mxu0 0.0
    %688 = vmatpush.msra.mxu0 0.0
    %689 = vmatpush.msra.mxu0 0.0
    %690 = vmatpush.msra.mxu0 %v545
    %691 = vmatmul.f32.gmra.mxu0 %v673
    %v692 = vpop.f32.mrf.mxu0
    %v693 = vadd.f32 0.0, %v692
    %694 = vdwg.mxu0
    %v696 = vsel %vm318, %v670, 0
    %v699 = vsel %vm318, %v693, 0
    %701 = vmatpush.msra.mxu0 0.0
    %702 = vmatpush.msra.mxu0 0.0
    %703 = vmatpush.msra.mxu0 0.0
    %704 = vmatpush.msra.mxu0 0.0
    %705 = vmatpush.msra.mxu0 0.0
    %706 = vmatpush.msra.mxu0 0.0
    %707 = vmatpush.msra.mxu0 0.0
    %708 = vmatpush.msra.mxu0 0.0
    %709 = vmatpush.msra.mxu0 0.0
    %710 = vmatpush.msra.mxu0 0.0
    %711 = vmatpush.msra.mxu0 0.0
    %712 = vmatpush.msra.mxu0 0.0
    %713 = vmatpush.msra.mxu0 0.0
    %714 = vmatpush.msra.mxu0 0.0
    %715 = vmatpush.msra.mxu0 0.0
    %716 = vmatpush.msra.mxu0 %v111
    %717 = vmatmul.f32.gmra.mxu0 %v696
    %v718 = vpop.f32.mrf.mxu0
    %v719 = vadd.f32 0.0, %v718
    %720 = vmatmul.f32.gmra.mxu0 %v699
    %v721 = vpop.f32.mrf.mxu0
    %v722 = vadd.f32 0.0, %v721
    %723 = vdwg.mxu0
    %v725 = vsel %vm318, %v442, 0
    %v728 = vsel %vm318, %v465, 0
    %730 = vmatpush.msra.mxu0 0.0
    %731 = vmatpush.msra.mxu0 0.0
    %732 = vmatpush.msra.mxu0 0.0
    %733 = vmatpush.msra.mxu0 0.0
    %734 = vmatpush.msra.mxu0 0.0
    %735 = vmatpush.msra.mxu0 0.0
    %736 = vmatpush.msra.mxu0 0.0
    %737 = vmatpush.msra.mxu0 0.0
    %738 = vmatpush.msra.mxu0 0.0
    %739 = vmatpush.msra.mxu0 0.0
    %740 = vmatpush.msra.mxu0 0.0
    %741 = vmatpush.msra.mxu0 0.0
    %742 = vmatpush.msra.mxu0 0.0
    %743 = vmatpush.msra.mxu0 0.0
    %744 = vmatpush.msra.mxu0 0.0
    %745 = vmatpush.msra.mxu0 %v110
    %746 = vmatmul.f32.gmra.mxu0 %v725
    %v747 = vpop.f32.mrf.mxu0
    %v748 = vadd.f32 %v719, %v747
    %749 = vmatmul.f32.gmra.mxu0 %v728
    %v750 = vpop.f32.mrf.mxu0
    %v751 = vadd.f32 %v722, %v750
    %752 = vdwg.mxu0
    %v754 = vperm.slane %v100, 0
    %756 = vmatpush.msra.mxu0 0.0
    %757 = vmatpush.msra.mxu0 0.0
    %758 = vmatpush.msra.mxu0 0.0
    %759 = vmatpush.msra.mxu0 0.0
    %760 = vmatpush.msra.mxu0 0.0
    %761 = vmatpush.msra.mxu0 0.0
    %762 = vmatpush.msra.mxu0 0.0
    %763 = vmatpush.msra.mxu0 0.0
    %764 = vmatpush.msra.mxu0 0.0
    %765 = vmatpush.msra.mxu0 0.0
    %766 = vmatpush.msra.mxu0 0.0
    %767 = vmatpush.msra.mxu0 0.0
    %768 = vmatpush.msra.mxu0 %v61
    %769 = vmatpush.msra.mxu0 %v60
    %770 = vmatpush.msra.mxu0 %v59
    %771 = vmatpush.msra.mxu0 %v58
    %772 = vmatmul.f32.gmra.mxu0 %v236
    %v773 = vpop.f32.mrf.mxu0
    %v774 = vadd.f32 %v754, %v773
    %775 = vmatmul.f32.gmra.mxu0 %v239
    %v776 = vpop.f32.mrf.mxu0
    %v777 = vadd.f32 %v754, %v776
    %778 = vdwg.mxu0
    %v779 = vmul.f32 %v774, 0.35355338
    %v780 = vmul.f32 %v777, 0.35355338
    %v782 = vperm.slane %v104, 0
    %784 = vmatpush.msra.mxu0 0.0
    %785 = vmatpush.msra.mxu0 0.0
    %786 = vmatpush.msra.mxu0 0.0
    %787 = vmatpush.msra.mxu0 0.0
    %788 = vmatpush.msra.mxu0 0.0
    %789 = vmatpush.msra.mxu0 0.0
    %790 = vmatpush.msra.mxu0 0.0
    %791 = vmatpush.msra.mxu0 0.0
    %792 = vmatpush.msra.mxu0 0.0
    %793 = vmatpush.msra.mxu0 0.0
    %794 = vmatpush.msra.mxu0 0.0
    %795 = vmatpush.msra.mxu0 0.0
    %796 = vmatpush.msra.mxu0 %v77
    %797 = vmatpush.msra.mxu0 %v76
    %798 = vmatpush.msra.mxu0 %v75
    %799 = vmatpush.msra.mxu0 %v74
    %800 = vmatmul.f32.gmra.mxu0 %v236
    %v801 = vpop.f32.mrf.mxu0
    %v802 = vadd.f32 %v782, %v801
    %803 = vmatmul.f32.gmra.mxu0 %v239
    %v804 = vpop.f32.mrf.mxu0
    %v805 = vadd.f32 %v782, %v804
    %806 = vdwg.mxu0
    %v808 = vperm.slane %v108, 0
    %810 = vmatpush.msra.mxu0 0.0
    %811 = vmatpush.msra.mxu0 0.0
    %812 = vmatpush.msra.mxu0 0.0
    %813 = vmatpush.msra.mxu0 0.0
    %814 = vmatpush.msra.mxu0 0.0
    %815 = vmatpush.msra.mxu0 0.0
    %816 = vmatpush.msra.mxu0 0.0
    %817 = vmatpush.msra.mxu0 0.0
    %818 = vmatpush.msra.mxu0 0.0
    %819 = vmatpush.msra.mxu0 0.0
    %820 = vmatpush.msra.mxu0 0.0
    %821 = vmatpush.msra.mxu0 0.0
    %822 = vmatpush.msra.mxu0 %v93
    %823 = vmatpush.msra.mxu0 %v92
    %824 = vmatpush.msra.mxu0 %v91
    %825 = vmatpush.msra.mxu0 %v90
    %826 = vmatmul.f32.gmra.mxu0 %v236
    %v827 = vpop.f32.mrf.mxu0
    %v828 = vadd.f32 %v808, %v827
    %829 = vmatmul.f32.gmra.mxu0 %v239
    %v830 = vpop.f32.mrf.mxu0
    %v831 = vadd.f32 %v808, %v830
    %832 = vdwg.mxu0
    %v834 = vsel %vm318, %v779, 0
    %v837 = vsel %vm318, %v802, 0
    %839 = vmatpush.xpose.msra.mxu0 0.0
    %840 = vmatpush.xpose.msra.mxu0 0.0
    %841 = vmatpush.xpose.msra.mxu0 0.0
    %842 = vmatpush.xpose.msra.mxu0 0.0
    %843 = vmatpush.xpose.msra.mxu0 0.0
    %844 = vmatpush.xpose.msra.mxu0 0.0
    %845 = vmatpush.xpose.msra.mxu0 0.0
    %846 = vmatpush.xpose.msra.mxu0 0.0
    %847 = vmatpush.xpose.msra.mxu0 0.0
    %848 = vmatpush.xpose.msra.mxu0 0.0
    %849 = vmatpush.xpose.msra.mxu0 0.0
    %850 = vmatpush.xpose.msra.mxu0 0.0
    %851 = vmatpush.xpose.msra.mxu0 0.0
    %852 = vmatpush.xpose.msra.mxu0 0.0
    %853 = vmatpush.xpose.msra.mxu0 0.0
    %854 = vmatpush.xpose.msra.mxu0 %v837
    %855 = vmatmul.f32.gmra.mxu0 %v834
    %v856 = vpop.f32.mrf.mxu0
    %v857 = vadd.f32 0.0, %v856
    %858 = vdwg.mxu0
    %v860 = vsel %vm318, %v780, 0
    %v863 = vsel %vm318, %v805, 0
    %865 = vmatpush.xpose.msra.mxu0 0.0
    %866 = vmatpush.xpose.msra.mxu0 0.0
    %867 = vmatpush.xpose.msra.mxu0 0.0
    %868 = vmatpush.xpose.msra.mxu0 0.0
    %869 = vmatpush.xpose.msra.mxu0 0.0
    %870 = vmatpush.xpose.msra.mxu0 0.0
    %871 = vmatpush.xpose.msra.mxu0 0.0
    %872 = vmatpush.xpose.msra.mxu0 0.0
    %873 = vmatpush.xpose.msra.mxu0 0.0
    %874 = vmatpush.xpose.msra.mxu0 0.0
    %875 = vmatpush.xpose.msra.mxu0 0.0
    %876 = vmatpush.xpose.msra.mxu0 0.0
    %877 = vmatpush.xpose.msra.mxu0 0.0
    %878 = vmatpush.xpose.msra.mxu0 0.0
    %879 = vmatpush.xpose.msra.mxu0 0.0
    %880 = vmatpush.xpose.msra.mxu0 %v863
    %881 = vmatmul.f32.gmra.mxu0 %v860
    %v882 = vpop.f32.mrf.mxu0
    %v883 = vadd.f32 0.0, %v882
    %884 = vdwg.mxu0
    %v885 = vsel %vm129, -1e+09, %v857
    %v886 = vsel %vm130, -1e+09, %v883
    %v887 = vsel %vm318, %v885, -inf
    %888 = vmax.xlane.f32.xlu0 %v887
    %v889 = vpop.xlane.xlu0 %888
    %v890 = vsel %vm318, %v886, -inf
    %891 = vmax.xlane.f32.xlu0 %v890
    %v892 = vpop.xlane.xlu0 %891
    %v893 = vsub.f32 %v885, %v889
    %v894 = vsub.f32 %v886, %v892
    %v895 = vmul.f32 %v893, 1.442695
    %v896 = vpow.pop %v895
    %v897 = vmul.f32 %v894, 1.442695
    %v898 = vpow.pop %v897
    %v899 = vsel %vm318, %v896, 0.0
    %900 = vadd.xlane.f32.xlu0 %v899
    %v901 = vpop.xlane.xlu0 %900
    %v902 = vsel %vm318, %v898, 0.0
    %903 = vadd.xlane.f32.xlu0 %v902
    %v904 = vpop.xlane.xlu0 %903
    %v905 = vrcp.pop %v901
    %v906 = vmul.f32 %v901, %v905
    %v907 = vsub.f32 1.0, %v906
    %v908 = vmul.f32 %v905, %v907
    %v909 = vadd.f32 %v905, %v908
    %vm910 = vweird.f32 %v901
    %vm911 = vweird.f32 %v905
    %vm912 = vmor %vm910, %vm911
    %v913 = vsel %vm912, %v905, %v909
    %v914 = vand.u32 2147483647, %v901
    %vm915 = vcmp.eq.f32.partialorder %v914, 8.507059e+37
    %v916 = vand.u32 %v901, 2147483648
    %v917 = vor.u32 1.1754944e-38, %v916
    %v918 = vsel %vm915, %v917, %v913
    %v919 = vmul.f32 %v896, %v918
    %v920 = vrcp.pop %v904
    %v921 = vmul.f32 %v904, %v920
    %v922 = vsub.f32 1.0, %v921
    %v923 = vmul.f32 %v920, %v922
    %v924 = vadd.f32 %v920, %v923
    %vm925 = vweird.f32 %v904
    %vm926 = vweird.f32 %v920
    %vm927 = vmor %vm925, %vm926
    %v928 = vsel %vm927, %v920, %v924
    %v929 = vand.u32 2147483647, %v904
    %vm930 = vcmp.eq.f32.partialorder %v929, 8.507059e+37
    %v931 = vand.u32 %v904, 2147483648
    %v932 = vor.u32 1.1754944e-38, %v931
    %v933 = vsel %vm930, %v932, %v928
    %v934 = vmul.f32 %v898, %v933
    %v936 = vsel %vm318, %v919, 0
    %938 = vmatpush.msra.mxu0 0.0
    %939 = vmatpush.msra.mxu0 0.0
    %940 = vmatpush.msra.mxu0 0.0
    %941 = vmatpush.msra.mxu0 0.0
    %942 = vmatpush.msra.mxu0 0.0
    %943 = vmatpush.msra.mxu0 0.0
    %944 = vmatpush.msra.mxu0 0.0
    %945 = vmatpush.msra.mxu0 0.0
    %946 = vmatpush.msra.mxu0 0.0
    %947 = vmatpush.msra.mxu0 0.0
    %948 = vmatpush.msra.mxu0 0.0
    %949 = vmatpush.msra.mxu0 0.0
    %950 = vmatpush.msra.mxu0 0.0
    %951 = vmatpush.msra.mxu0 0.0
    %952 = vmatpush.msra.mxu0 0.0
    %953 = vmatpush.msra.mxu0 %v828
    %954 = vmatmul.f32.gmra.mxu0 %v936
    %v955 = vpop.f32.mrf.mxu0
    %v956 = vadd.f32 0.0, %v955
    %957 = vdwg.mxu0
    %v959 = vsel %vm318, %v934, 0
    %961 = vmatpush.msra.mxu0 0.0
    %962 = vmatpush.msra.mxu0 0.0
    %963 = vmatpush.msra.mxu0 0.0
    %964 = vmatpush.msra.mxu0 0.0
    %965 = vmatpush.msra.mxu0 0.0
    %966 = vmatpush.msra.mxu0 0.0
    %967 = vmatpush.msra.mxu0 0.0
    %968 = vmatpush.msra.mxu0 0.0
    %969 = vmatpush.msra.mxu0 0.0
    %970 = vmatpush.msra.mxu0 0.0
    %971 = vmatpush.msra.mxu0 0.0
    %972 = vmatpush.msra.mxu0 0.0
    %973 = vmatpush.msra.mxu0 0.0
    %974 = vmatpush.msra.mxu0 0.0
    %975 = vmatpush.msra.mxu0 0.0
    %976 = vmatpush.msra.mxu0 %v831
    %977 = vmatmul.f32.gmra.mxu0 %v959
    %v978 = vpop.f32.mrf.mxu0
    %v979 = vadd.f32 0.0, %v978
    %980 = vdwg.mxu0
    %v982 = vsel %vm318, %v956, 0
    %v985 = vsel %vm318, %v979, 0
    %987 = vmatpush.msra.mxu0 0.0
    %988 = vmatpush.msra.mxu0 0.0
    %989 = vmatpush.msra.mxu0 0.0
    %990 = vmatpush.msra.mxu0 0.0
    %991 = vmatpush.msra.mxu0 0.0
    %992 = vmatpush.msra.mxu0 0.0
    %993 = vmatpush.msra.mxu0 0.0
    %994 = vmatpush.msra.mxu0 0.0
    %995 = vmatpush.msra.mxu0 0.0
    %996 = vmatpush.msra.mxu0 0.0
    %997 = vmatpush.msra.mxu0 0.0
    %998 = vmatpush.msra.mxu0 0.0
    %999 = vmatpush.msra.mxu0 0.0
    %1000 = vmatpush.msra.mxu0 0.0
    %1001 = vmatpush.msra.mxu0 0.0
    %1002 = vmatpush.msra.mxu0 %v112
    %1003 = vmatmul.f32.gmra.mxu0 %v982
    %v1004 = vpop.f32.mrf.mxu0
    %v1005 = vadd.f32 0.0, %v1004
    %1006 = vmatmul.f32.gmra.mxu0 %v985
    %v1007 = vpop.f32.mrf.mxu0
    %v1008 = vadd.f32 0.0, %v1007
    %1009 = vdwg.mxu0
    %v1010 = vadd.f32 %v748, %v1005
    %v1011 = vadd.f32 %v751, %v1008
    %v1013 = vperm.slane %v101, 0
    %1015 = vmatpush.msra.mxu0 0.0
    %1016 = vmatpush.msra.mxu0 0.0
    %1017 = vmatpush.msra.mxu0 0.0
    %1018 = vmatpush.msra.mxu0 0.0
    %1019 = vmatpush.msra.mxu0 0.0
    %1020 = vmatpush.msra.mxu0 0.0
    %1021 = vmatpush.msra.mxu0 0.0
    %1022 = vmatpush.msra.mxu0 0.0
    %1023 = vmatpush.msra.mxu0 0.0
    %1024 = vmatpush.msra.mxu0 0.0
    %1025 = vmatpush.msra.mxu0 0.0
    %1026 = vmatpush.msra.mxu0 0.0
    %1027 = vmatpush.msra.mxu0 %v65
    %1028 = vmatpush.msra.mxu0 %v64
    %1029 = vmatpush.msra.mxu0 %v63
    %1030 = vmatpush.msra.mxu0 %v62
    %1031 = vmatmul.f32.gmra.mxu0 %v236
    %v1032 = vpop.f32.mrf.mxu0
    %v1033 = vadd.f32 %v1013, %v1032
    %1034 = vmatmul.f32.gmra.mxu0 %v239
    %v1035 = vpop.f32.mrf.mxu0
    %v1036 = vadd.f32 %v1013, %v1035
    %1037 = vdwg.mxu0
    %v1038 = vmul.f32 %v1033, 0.35355338
    %v1039 = vmul.f32 %v1036, 0.35355338
    %v1041 = vperm.slane %v105, 0
    %1043 = vmatpush.msra.mxu0 0.0
    %1044 = vmatpush.msra.mxu0 0.0
    %1045 = vmatpush.msra.mxu0 0.0
    %1046 = vmatpush.msra.mxu0 0.0
    %1047 = vmatpush.msra.mxu0 0.0
    %1048 = vmatpush.msra.mxu0 0.0
    %1049 = vmatpush.msra.mxu0 0.0
    %1050 = vmatpush.msra.mxu0 0.0
    %1051 = vmatpush.msra.mxu0 0.0
    %1052 = vmatpush.msra.mxu0 0.0
    %1053 = vmatpush.msra.mxu0 0.0
    %1054 = vmatpush.msra.mxu0 0.0
    %1055 = vmatpush.msra.mxu0 %v81
    %1056 = vmatpush.msra.mxu0 %v80
    %1057 = vmatpush.msra.mxu0 %v79
    %1058 = vmatpush.msra.mxu0 %v78
    %1059 = vmatmul.f32.gmra.mxu0 %v236
    %v1060 = vpop.f32.mrf.mxu0
    %v1061 = vadd.f32 %v1041, %v1060
    %1062 = vmatmul.f32.gmra.mxu0 %v239
    %v1063 = vpop.f32.mrf.mxu0
    %v1064 = vadd.f32 %v1041, %v1063
    %1065 = vdwg.mxu0
    %v1067 = vperm.slane %v109, 0
    %1069 = vmatpush.msra.mxu0 0.0
    %1070 = vmatpush.msra.mxu0 0.0
    %1071 = vmatpush.msra.mxu0 0.0
    %1072 = vmatpush.msra.mxu0 0.0
    %1073 = vmatpush.msra.mxu0 0.0
    %1074 = vmatpush.msra.mxu0 0.0
    %1075 = vmatpush.msra.mxu0 0.0
    %1076 = vmatpush.msra.mxu0 0.0
    %1077 = vmatpush.msra.mxu0 0.0
    %1078 = vmatpush.msra.mxu0 0.0
    %1079 = vmatpush.msra.mxu0 0.0
    %1080 = vmatpush.msra.mxu0 0.0
    %1081 = vmatpush.msra.mxu0 %v97
    %1082 = vmatpush.msra.mxu0 %v96
    %1083 = vmatpush.msra.mxu0 %v95
    %1084 = vmatpush.msra.mxu0 %v94
    %1085 = vmatmul.f32.gmra.mxu0 %v236
    %v1086 = vpop.f32.mrf.mxu0
    %v1087 = vadd.f32 %v1067, %v1086
    %1088 = vmatmul.f32.gmra.mxu0 %v239
    %v1089 = vpop.f32.mrf.mxu0
    %v1090 = vadd.f32 %v1067, %v1089
    %1091 = vdwg.mxu0
    %v1093 = vsel %vm318, %v1038, 0
    %v1096 = vsel %vm318, %v1061, 0
    %1098 = vmatpush.xpose.msra.mxu0 0.0
    %1099 = vmatpush.xpose.msra.mxu0 0.0
    %1100 = vmatpush.xpose.msra.mxu0 0.0
    %1101 = vmatpush.xpose.msra.mxu0 0.0
    %1102 = vmatpush.xpose.msra.mxu0 0.0
    %1103 = vmatpush.xpose.msra.mxu0 0.0
    %1104 = vmatpush.xpose.msra.mxu0 0.0
    %1105 = vmatpush.xpose.msra.mxu0 0.0
    %1106 = vmatpush.xpose.msra.mxu0 0.0
    %1107 = vmatpush.xpose.msra.mxu0 0.0
    %1108 = vmatpush.xpose.msra.mxu0 0.0
    %1109 = vmatpush.xpose.msra.mxu0 0.0
    %1110 = vmatpush.xpose.msra.mxu0 0.0
    %1111 = vmatpush.xpose.msra.mxu0 0.0
    %1112 = vmatpush.xpose.msra.mxu0 0.0
    %1113 = vmatpush.xpose.msra.mxu0 %v1096
    %1114 = vmatmul.f32.gmra.mxu0 %v1093
    %v1115 = vpop.f32.mrf.mxu0
    %v1116 = vadd.f32 0.0, %v1115
    %1117 = vdwg.mxu0
    %v1119 = vsel %vm318, %v1039, 0
    %v1122 = vsel %vm318, %v1064, 0
    %1124 = vmatpush.xpose.msra.mxu0 0.0
    %1125 = vmatpush.xpose.msra.mxu0 0.0
    %1126 = vmatpush.xpose.msra.mxu0 0.0
    %1127 = vmatpush.xpose.msra.mxu0 0.0
    %1128 = vmatpush.xpose.msra.mxu0 0.0
    %1129 = vmatpush.xpose.msra.mxu0 0.0
    %1130 = vmatpush.xpose.msra.mxu0 0.0
    %1131 = vmatpush.xpose.msra.mxu0 0.0
    %1132 = vmatpush.xpose.msra.mxu0 0.0
    %1133 = vmatpush.xpose.msra.mxu0 0.0
    %1134 = vmatpush.xpose.msra.mxu0 0.0
    %1135 = vmatpush.xpose.msra.mxu0 0.0
    %1136 = vmatpush.xpose.msra.mxu0 0.0
    %1137 = vmatpush.xpose.msra.mxu0 0.0
    %1138 = vmatpush.xpose.msra.mxu0 0.0
    %1139 = vmatpush.xpose.msra.mxu0 %v1122
    %1140 = vmatmul.f32.gmra.mxu0 %v1119
    %v1141 = vpop.f32.mrf.mxu0
    %v1142 = vadd.f32 0.0, %v1141
    %1143 = vdwg.mxu0
    %v1144 = vsel %vm129, -1e+09, %v1116
    %v1145 = vsel %vm130, -1e+09, %v1142
    %v1146 = vsel %vm318, %v1144, -inf
    %1147 = vmax.xlane.f32.xlu0 %v1146
    %v1148 = vpop.xlane.xlu0 %1147
    %v1149 = vsel %vm318, %v1145, -inf
    %1150 = vmax.xlane.f32.xlu0 %v1149
    %v1151 = vpop.xlane.xlu0 %1150
    %v1152 = vsub.f32 %v1144, %v1148
    %v1153 = vsub.f32 %v1145, %v1151
    %v1154 = vmul.f32 %v1152, 1.442695
    %v1155 = vpow.pop %v1154
    %v1156 = vmul.f32 %v1153, 1.442695
    %v1157 = vpow.pop %v1156
    %v1158 = vsel %vm318, %v1155, 0.0
    %1159 = vadd.xlane.f32.xlu0 %v1158
    %v1160 = vpop.xlane.xlu0 %1159
    %v1161 = vsel %vm318, %v1157, 0.0
    %1162 = vadd.xlane.f32.xlu0 %v1161
    %v1163 = vpop.xlane.xlu0 %1162
    %v1164 = vrcp.pop %v1160
    %v1165 = vmul.f32 %v1160, %v1164
    %v1166 = vsub.f32 1.0, %v1165
    %v1167 = vmul.f32 %v1164, %v1166
    %v1168 = vadd.f32 %v1164, %v1167
    %vm1169 = vweird.f32 %v1160
    %vm1170 = vweird.f32 %v1164
    %vm1171 = vmor %vm1169, %vm1170
    %v1172 = vsel %vm1171, %v1164, %v1168
    %v1173 = vand.u32 2147483647, %v1160
    %vm1174 = vcmp.eq.f32.partialorder %v1173, 8.507059e+37
    %v1175 = vand.u32 %v1160, 2147483648
    %v1176 = vor.u32 1.1754944e-38, %v1175
    %v1177 = vsel %vm1174, %v1176, %v1172
    %v1178 = vmul.f32 %v1155, %v1177
    %v1179 = vrcp.pop %v1163
    %v1180 = vmul.f32 %v1163, %v1179
    %v1181 = vsub.f32 1.0, %v1180
    %v1182 = vmul.f32 %v1179, %v1181
    %v1183 = vadd.f32 %v1179, %v1182
    %vm1184 = vweird.f32 %v1163
    %vm1185 = vweird.f32 %v1179
    %vm1186 = vmor %vm1184, %vm1185
    %v1187 = vsel %vm1186, %v1179, %v1183
    %v1188 = vand.u32 2147483647, %v1163
    %vm1189 = vcmp.eq.f32.partialorder %v1188, 8.507059e+37
    %v1190 = vand.u32 %v1163, 2147483648
    %v1191 = vor.u32 1.1754944e-38, %v1190
    %v1192 = vsel %vm1189, %v1191, %v1187
    %v1193 = vmul.f32 %v1157, %v1192
    %v1195 = vsel %vm318, %v1178, 0
    %1197 = vmatpush.msra.mxu0 0.0
    %1198 = vmatpush.msra.mxu0 0.0
    %1199 = vmatpush.msra.mxu0 0.0
    %1200 = vmatpush.msra.mxu0 0.0
    %1201 = vmatpush.msra.mxu0 0.0
    %1202 = vmatpush.msra.mxu0 0.0
    %1203 = vmatpush.msra.mxu0 0.0
    %1204 = vmatpush.msra.mxu0 0.0
    %1205 = vmatpush.msra.mxu0 0.0
    %1206 = vmatpush.msra.mxu0 0.0
    %1207 = vmatpush.msra.mxu0 0.0
    %1208 = vmatpush.msra.mxu0 0.0
    %1209 = vmatpush.msra.mxu0 0.0
    %1210 = vmatpush.msra.mxu0 0.0
    %1211 = vmatpush.msra.mxu0 0.0
    %1212 = vmatpush.msra.mxu0 %v1087
    %1213 = vmatmul.f32.gmra.mxu0 %v1195
    %v1214 = vpop.f32.mrf.mxu0
    %v1215 = vadd.f32 0.0, %v1214
    %1216 = vdwg.mxu0
    %v1218 = vsel %vm318, %v1193, 0
    %1220 = vmatpush.msra.mxu0 0.0
    %1221 = vmatpush.msra.mxu0 0.0
    %1222 = vmatpush.msra.mxu0 0.0
    %1223 = vmatpush.msra.mxu0 0.0
    %1224 = vmatpush.msra.mxu0 0.0
    %1225 = vmatpush.msra.mxu0 0.0
    %1226 = vmatpush.msra.mxu0 0.0
    %1227 = vmatpush.msra.mxu0 0.0
    %1228 = vmatpush.msra.mxu0 0.0
    %1229 = vmatpush.msra.mxu0 0.0
    %1230 = vmatpush.msra.mxu0 0.0
    %1231 = vmatpush.msra.mxu0 0.0
    %1232 = vmatpush.msra.mxu0 0.0
    %1233 = vmatpush.msra.mxu0 0.0
    %1234 = vmatpush.msra.mxu0 0.0
    %1235 = vmatpush.msra.mxu0 %v1090
    %1236 = vmatmul.f32.gmra.mxu0 %v1218
    %v1237 = vpop.f32.mrf.mxu0
    %v1238 = vadd.f32 0.0, %v1237
    %1239 = vdwg.mxu0
    %v1241 = vsel %vm318, %v1215, 0
    %v1244 = vsel %vm318, %v1238, 0
    %1246 = vmatpush.msra.mxu0 0.0
    %1247 = vmatpush.msra.mxu0 0.0
    %1248 = vmatpush.msra.mxu0 0.0
    %1249 = vmatpush.msra.mxu0 0.0
    %1250 = vmatpush.msra.mxu0 0.0
    %1251 = vmatpush.msra.mxu0 0.0
    %1252 = vmatpush.msra.mxu0 0.0
    %1253 = vmatpush.msra.mxu0 0.0
    %1254 = vmatpush.msra.mxu0 0.0
    %1255 = vmatpush.msra.mxu0 0.0
    %1256 = vmatpush.msra.mxu0 0.0
    %1257 = vmatpush.msra.mxu0 0.0
    %1258 = vmatpush.msra.mxu0 0.0
    %1259 = vmatpush.msra.mxu0 0.0
    %1260 = vmatpush.msra.mxu0 0.0
    %1261 = vmatpush.msra.mxu0 %v113
    %1262 = vmatmul.f32.gmra.mxu0 %v1241
    %v1263 = vpop.f32.mrf.mxu0
    %v1264 = vadd.f32 0.0, %v1263
    %1265 = vmatmul.f32.gmra.mxu0 %v1244
    %v1266 = vpop.f32.mrf.mxu0
    %v1267 = vadd.f32 0.0, %v1266
    %1268 = vdwg.mxu0
    %v1269 = vadd.f32 %v1010, %v1264
    %v1270 = vadd.f32 %v1011, %v1267
    %v1271 = vadd.f32 %v42, %v1269
    %v1272 = vadd.f32 %v43, %v1270
    %v1274 = vperm.slane %v114, 0
    %v1276 = vadd.f32 %v1271, %v1274
    %v1277 = vadd.f32 %v1272, %v1274
    %v1278 = vsel %vm131, %v1276, 0.0
    %1279 = vadd.xlane.f32.xlu0 %v1278
    %v1280 = vpop.xlane.xlu0 %1279
    %v1281 = vsel %vm131, %v1277, 0.0
    %1282 = vadd.xlane.f32.xlu0 %v1281
    %v1283 = vpop.xlane.xlu0 %1282
    %v1284 = vmul.f32 %v1280, %v144
    %v1285 = vmul.f32 %v1283, %v144
    %v1286 = vsub.f32 %v1276, %v1284
    %v1287 = vsub.f32 %v1277, %v1285
    %v1288 = vmul.f32 %v1286, %v1286
    %v1289 = vmul.f32 %v1287, %v1287
    %v1290 = vsel %vm131, %v1288, 0.0
    %1291 = vadd.xlane.f32.xlu0 %v1290
    %v1292 = vpop.xlane.xlu0 %1291
    %v1293 = vsel %vm131, %v1289, 0.0
    %1294 = vadd.xlane.f32.xlu0 %v1293
    %v1295 = vpop.xlane.xlu0 %1294
    %v1296 = vmul.f32 %v1292, %v163
    %v1297 = vmul.f32 %v1295, %v163
    %v1299 = vperm.slane %v47, 0
    %v1301 = vmul.f32 %v1299, %v1286
    %v1302 = vmul.f32 %v1299, %v1287
    %v1303 = vrsqrt.pop %v1296
    %v1304 = vmul.f32 %v1303, %v1296
    %v1305 = vmul.f32 %v1304, %v1303
    %v1306 = vmul.f32 0.5, %v1305
    %v1307 = vsub.f32 1.5, %v1306
    %v1308 = vmul.f32 %v1303, %v1307
    %v1309 = vmul.f32 %v1296, %v1308
    %vm1310 = vcmp.eq.f32.partialorder %v1296, inf
    %v1311 = vsel %vm1310, %v1296, %v1309
    %vm1312 = vcmp.eq.f32.partialorder %v1296, 0.0
    %v1313 = vand.u32 %v1296, 2147483648
    %v1314 = vsel %vm1312, %v1313, %v1311
    %v1315 = vrsqrt.pop %v1297
    %v1316 = vmul.f32 %v1315, %v1297
    %v1317 = vmul.f32 %v1316, %v1315
    %v1318 = vmul.f32 0.5, %v1317
    %v1319 = vsub.f32 1.5, %v1318
    %v1320 = vmul.f32 %v1315, %v1319
    %v1321 = vmul.f32 %v1297, %v1320
    %vm1322 = vcmp.eq.f32.partialorder %v1297, inf
    %v1323 = vsel %vm1322, %v1297, %v1321
    %vm1324 = vcmp.eq.f32.partialorder %v1297, 0.0
    %v1325 = vand.u32 %v1297, 2147483648
    %v1326 = vsel %vm1324, %v1325, %v1323
    %v1327 = vadd.f32 %v1314, 1e-06
    %v1328 = vadd.f32 %v1326, 1e-06
    %v1329 = vrcp.pop %v1327
    %v1330 = vmul.f32 %v1327, %v1329
    %v1331 = vsub.f32 1.0, %v1330
    %v1332 = vmul.f32 %v1329, %v1331
    %v1333 = vadd.f32 %v1329, %v1332
    %vm1334 = vweird.f32 %v1327
    %vm1335 = vweird.f32 %v1329
    %vm1336 = vmor %vm1334, %vm1335
    %v1337 = vsel %vm1336, %v1329, %v1333
    %v1338 = vand.u32 2147483647, %v1327
    %vm1339 = vcmp.eq.f32.partialorder %v1338, 8.507059e+37
    %v1340 = vand.u32 %v1327, 2147483648
    %v1341 = vor.u32 1.1754944e-38, %v1340
    %v1342 = vsel %vm1339, %v1341, %v1337
    %v1343 = vmul.f32 %v1301, %v1342
    %v1344 = vrcp.pop %v1328
    %v1345 = vmul.f32 %v1328, %v1344
    %v1346 = vsub.f32 1.0, %v1345
    %v1347 = vmul.f32 %v1344, %v1346
    %v1348 = vadd.f32 %v1344, %v1347
    %vm1349 = vweird.f32 %v1328
    %vm1350 = vweird.f32 %v1344
    %vm1351 = vmor %vm1349, %vm1350
    %v1352 = vsel %vm1351, %v1344, %v1348
    %v1353 = vand.u32 2147483647, %v1328
    %vm1354 = vcmp.eq.f32.partialorder %v1353, 8.507059e+37
    %v1355 = vand.u32 %v1328, 2147483648
    %v1356 = vor.u32 1.1754944e-38, %v1355
    %v1357 = vsel %vm1354, %v1356, %v1352
    %v1358 = vmul.f32 %v1302, %v1357
    %v1360 = vperm.slane %v49, 0
    %v1362 = vadd.f32 %v1343, %v1360
    %v1363 = vadd.f32 %v1358, %v1360
    %v1365 = vperm.slane %v119, 0
    %v1368 = vsel %vm131, %v1362, 0
    %v1371 = vsel %vm131, %v1363, 0
    %1373 = vmatpush.msra.mxu0 0.0
    %1374 = vmatpush.msra.mxu0 0.0
    %1375 = vmatpush.msra.mxu0 0.0
    %1376 = vmatpush.msra.mxu0 0.0
    %1377 = vmatpush.msra.mxu0 0.0
    %1378 = vmatpush.msra.mxu0 0.0
    %1379 = vmatpush.msra.mxu0 0.0
    %1380 = vmatpush.msra.mxu0 0.0
    %1381 = vmatpush.msra.mxu0 0.0
    %1382 = vmatpush.msra.mxu0 0.0
    %1383 = vmatpush.msra.mxu0 0.0
    %1384 = vmatpush.msra.mxu0 0.0
    %1385 = vmatpush.msra.mxu0 %v118
    %1386 = vmatpush.msra.mxu0 %v117
    %1387 = vmatpush.msra.mxu0 %v116
    %1388 = vmatpush.msra.mxu0 %v115
    %1389 = vmatmul.f32.gmra.mxu0 %v1368
    %v1390 = vpop.f32.mrf.mxu0
    %v1391 = vadd.f32 %v1365, %v1390
    %1392 = vmatmul.f32.gmra.mxu0 %v1371
    %v1393 = vpop.f32.mrf.mxu0
    %v1394 = vadd.f32 %v1365, %v1393
    %1395 = vdwg.mxu0
    %v1396 = vmax.f32 %v1391, 0.0
    %v1397 = vmax.f32 %v1394, 0.0
    %vm1398 = vcmask 523264
    %v1400 = vsel %vm1398, %v1396, 0
    %v1403 = vsel %vm1398, %v1397, 0
    %1405 = vmatpush.msra.mxu0 0.0
    %1406 = vmatpush.msra.mxu0 0.0
    %1407 = vmatpush.msra.mxu0 0.0
    %1408 = vmatpush.msra.mxu0 0.0
    %1409 = vmatpush.msra.mxu0 0.0
    %1410 = vmatpush.msra.mxu0 0.0
    %1411 = vmatpush.msra.mxu0 0.0
    %1412 = vmatpush.msra.mxu0 0.0
    %1413 = vmatpush.msra.mxu0 %v127
    %1414 = vmatpush.msra.mxu0 %v126
    %1415 = vmatpush.msra.mxu0 %v125
    %1416 = vmatpush.msra.mxu0 %v124
    %1417 = vmatpush.msra.mxu0 %v123
    %1418 = vmatpush.msra.mxu0 %v122
    %1419 = vmatpush.msra.mxu0 %v121
    %1420 = vmatpush.msra.mxu0 %v120
    %1421 = vmatmul.f32.gmra.mxu0 %v1400
    %v1422 = vpop.f32.mrf.mxu0
    %v1423 = vadd.f32 0.0, %v1422
    %1424 = vmatmul.f32.gmra.mxu0 %v1403
    %v1425 = vpop.f32.mrf.mxu0
    %v1426 = vadd.f32 0.0, %v1425
    %1427 = vdwg.mxu0
    %v1428 = vadd.f32 %v1276, %v1423
    %v1429 = vadd.f32 %v1277, %v1426
    %v1431 = vperm.slane %v128, 0
    %v1433 = vadd.f32 %v1428, %v1431
    %v1434 = vadd.f32 %v1429, %v1431
    %1435 = vst.msk [vmem:[#allocation2] sm:$0xff] %vm131, %v1433
    %1436 = vst.msk [vmem:[#allocation2 + $0x8] sm:$0xff] %vm131, %v1434
    // Predicated region
    $region50: #{encoder_layer.1} parent=1 // pred_check
      _
    $region51: #{encoder_layer.1} parent=1 // pred_check_branch
      %1438 = sbr.rel (0) target = $region53
    $region52: #{encoder_layer.1} parent=1 // pred_region
      %1440 = vsyncadd [#allocation3], 0
      %s1441 = sshll.u32 [#allocation2], 4
      %s1442 = int_to_ptr.vmem [resolvable:$true] %s1441
      %s1443 = sshll.u32 %s12, 4
      %s1444 = int_to_ptr.hbm [resolvable:$true] %s1443
      %1449 = dma.vmem_to_hbm [thread:$0]  %s1442, 256, %s1444, [#allocation3], 128, 128, 8
    $region53: #{encoder_layer.1} parent=1 // pred_fallthru
      _
    // Predicated region
    $region54: #{encoder_layer.1} parent=1 // pred_check
      _
    $region55: #{encoder_layer.1} parent=1 // pred_check_branch
      %1451 = sbr.rel (0) target = $region57
    $region56: #{encoder_layer.1} parent=1 // pred_region
      %1453 = dma.done [#allocation3], 256
    $region57: #{encoder_layer.1} parent=1 // pred_fallthru
      _
    %1454 = vsyncpa [#allocation3], 1

</llo_original>
